<compile_context>
chip_gen: v7x
topology: tpu7x:2x2x1
jax: 0.10.0
libtpu: 0.0.40
codegen_flags: <defaults>
</compile_context>

<pallas_src>
import jax
import jax.numpy as jnp
from jax.experimental import pallas as pl
from jax.experimental.pallas import tpu as pltpu


def _round_up(x, m):
    return (x + m - 1) // m * m


def make_attn_decoder_kernel(L, H, head_sizes, HP, OUTW):
    """Kernel closure over static sizes (L, H, per-head widths, padded widths)."""

    def kernel(emb_ref, hid_ref, cell_ref, encf_ref,
               wlh_ref, blh_ref, wlo_ref, blo_ref, wat_ref,
               wxh_ref, bxh_ref, whd_ref, bhd_ref,
               out_ref):
        f32 = jnp.float32
        emb = emb_ref[...]           # (TB, H)
        hid = hid_ref[...]           # (TB, H)
        cell = cell_ref[...]         # (TB, H)
        encf = encf_ref[...]         # (TB*L, H)  -- already flat, no reshape for the matmul
        TB = emb.shape[0]

        # hidden = linear_hidden(hidden)
        hid_lin = jnp.dot(hid, wlh_ref[...], preferred_element_type=f32) + blh_ref[...]

        # encoder_outputs = linear_all_output(encoder_outputs)  (flat 2-D matmul)
        enc_lin_flat = (jnp.dot(encf, wlo_ref[...], preferred_element_type=f32)
                        + blo_ref[...])                                  # (TB*L, H)
        # sublane-aligned split of the leading dim only (minor dim untouched)
        enc_lin = enc_lin_flat.reshape(TB, L, H)                         # (TB, L, H)

        # additive attention: tanh(hidden + enc_lin), scores = w_attn . align
        align = jnp.tanh(hid_lin[:, None, :] + enc_lin)                  # (TB, L, H)
        # attention bias dropped: constant shift cancels in softmax
        scores = jnp.sum(align * wat_ref[...], axis=-1)                  # (TB, L)
        m = jnp.max(scores, axis=-1, keepdims=True)
        e = jnp.exp(scores - m)
        attn_w = e / jnp.sum(e, axis=-1, keepdims=True)                  # (TB, L)

        # attn_applied = bmm(attn_weights, enc_lin)
        attn_applied = jnp.sum(attn_w[:, :, None] * enc_lin, axis=1)     # (TB, H)

        # LSTM input
        x = emb + attn_applied                                           # (TB, H)

        # fused single-step LSTM (PyTorch gate order i, f, g, o)
        xh = jnp.concatenate([x, hid_lin], axis=-1)                      # (TB, 2H)
        gates = jnp.dot(xh, wxh_ref[...], preferred_element_type=f32) + bxh_ref[...]  # (TB, 4H)
        i_g = jax.nn.sigmoid(gates[:, 0:H])
        f_g = jax.nn.sigmoid(gates[:, H:2 * H])
        g_g = jnp.tanh(gates[:, 2 * H:3 * H])
        o_g = jax.nn.sigmoid(gates[:, 3 * H:4 * H])
        c_new = f_g * cell + i_g * g_g
        h_new = o_g * jnp.tanh(c_new)

        # fused output heads: one matmul into a lane-dense (TB, HP) logits slab,
        # per-head log_softmax via lane masks.
        logits = jnp.dot(h_new, whd_ref[...], preferred_element_type=f32) + bhd_ref[...]
        lane = jax.lax.broadcasted_iota(jnp.int32, logits.shape, 1)
        heads = jnp.zeros_like(logits)
        off = 0
        for n in head_sizes:
            mask = (lane >= off) & (lane < off + n)
            seg = jnp.where(mask, logits, -jnp.inf)
            mh = jnp.max(seg, axis=-1, keepdims=True)
            eh = jnp.exp(seg - mh)                   # exp(-inf) = 0 outside the segment
            lse = jnp.log(jnp.sum(eh, axis=-1, keepdims=True))
            heads = jnp.where(mask, logits - mh - lse, heads)
            off += n

        # single lane-dense output slab: [heads | h_new | c_new | attn_w | zero pad]
        parts = [heads, h_new, c_new, attn_w]
        pad = OUTW - HP - 2 * H - L
        if pad:
            parts.append(jnp.zeros((TB, pad), f32))
        out_ref[...] = jnp.concatenate(parts, axis=-1).astype(out_ref.dtype)

    return kernel


def init_params(key, hidden_size, n_color, n_shape, n_mat, n_size, n_emb=20):
    H = hidden_size
    ks = jax.random.split(key, 24)
    s = 0.1

    def w(k, shape):
        return (s * jax.random.normal(k, shape)).astype(jnp.float32)

    return dict(
        emb_color=w(ks[0], (n_emb, H // 4)),
        emb_shape=w(ks[1], (n_emb, H // 4)),
        emb_mat=w(ks[2], (n_emb, H // 4)),
        emb_size=w(ks[3], (n_emb, H // 4)),
        # Linear weights stored PyTorch-style (out, in); biases (out,)
        w_lin_hidden=w(ks[4], (H, H)), b_lin_hidden=w(ks[5], (H,)),
        w_lin_all=w(ks[6], (H, H)), b_lin_all=w(ks[7], (H,)),
        w_attn=w(ks[8], (1, H)), b_attn=w(ks[9], (1,)),
        w_ih=w(ks[10], (4 * H, H)), b_ih=w(ks[11], (4 * H,)),
        w_hh=w(ks[12], (4 * H, H)), b_hh=w(ks[13], (4 * H,)),
        w_out_color=w(ks[14], (n_color, H)), b_out_color=w(ks[15], (n_color,)),
        w_out_shape=w(ks[16], (n_shape, H)), b_out_shape=w(ks[17], (n_shape,)),
        w_out_mat=w(ks[18], (n_mat, H)), b_out_mat=w(ks[19], (n_mat,)),
        w_out_size=w(ks[20], (n_size, H)), b_out_size=w(ks[21], (n_size,)),
    )


def attn_decoder_forward(params, input_color, input_shape, input_size, input_mat,
                         hidden, cell_state, encoder_outputs):
    f32 = jnp.float32
    B, L, H = encoder_outputs.shape

    # --- glue: embedding lookups + concat (color, shape, size, mat) ---
    emb = jnp.concatenate([
        params['emb_color'][input_color],
        params['emb_shape'][input_shape],
        params['emb_size'][input_size],
        params['emb_mat'][input_mat],
    ], axis=-1).astype(f32)                                             # (B, H)

    hid2 = hidden.reshape(B, H).astype(f32)
    cell2 = cell_state.reshape(B, H).astype(f32)
    encf = encoder_outputs.reshape(B * L, H).astype(f32)                # flatten in HBM (free)

    # --- glue: pre-transpose weights to (in, out); biases to (1, out) ---
    T = lambda w: jnp.asarray(w, f32).T
    R = lambda b: jnp.asarray(b, f32).reshape(1, -1)
    wlh, blh = T(params['w_lin_hidden']), R(params['b_lin_hidden'])
    wlo, blo = T(params['w_lin_all']), R(params['b_lin_all'])
    wat = jnp.asarray(params['w_attn'], f32)                            # (1, H); bias dropped

    # fused LSTM weight / bias
    wxh = jnp.concatenate([T(params['w_ih']), T(params['w_hh'])], axis=0)   # (2H, 4H)
    bxh = R(params['b_ih'] + params['b_hh'])                                # (1, 4H)

    # fused + lane-padded output heads (order: color, shape, mat, size)
    head_ws = [params['w_out_color'], params['w_out_shape'],
               params['w_out_mat'], params['w_out_size']]
    head_bs = [params['b_out_color'], params['b_out_shape'],
               params['b_out_mat'], params['b_out_size']]
    head_sizes = tuple(int(w.shape[0]) for w in head_ws)
    n_tot = sum(head_sizes)
    HP = _round_up(n_tot, 128)
    whd = jnp.pad(jnp.concatenate([T(w) for w in head_ws], axis=1),
                  ((0, 0), (0, HP - n_tot))).astype(f32)                    # (H, HP)
    bhd = jnp.pad(jnp.concatenate([jnp.asarray(b, f32) for b in head_bs]),
                  (0, HP - n_tot)).reshape(1, HP)                           # (1, HP)

    state_w = _round_up(2 * H + L, 128)
    OUTW = HP + state_w

    # batch tiling: whole batch for small B, 128-row tiles (parallel grid) for large B
    TB = B if (B <= 128 or B % 128 != 0) else 128
    assert B % TB == 0
    grid = (B // TB,)

    act_spec = pl.BlockSpec((TB, H), lambda i: (i, 0))
    enc_spec = pl.BlockSpec((TB * L, H), lambda i: (i, 0))
    w_spec = lambda a: pl.BlockSpec(a.shape, lambda i: (0,) * a.ndim)
    out_spec = pl.BlockSpec((TB, OUTW), lambda i: (i, 0))

    weights = [wlh, blh, wlo, blo, wat, wxh, bxh, whd, bhd]
    kernel = make_attn_decoder_kernel(L, H, head_sizes, HP, OUTW)

    slab = pl.pallas_call(
        kernel,
        out_shape=jax.ShapeDtypeStruct((B, OUTW), f32),
        grid=grid,
        in_specs=[act_spec, act_spec, act_spec, enc_spec] + [w_spec(a) for a in weights],
        out_specs=out_spec,
        compiler_params=pltpu.CompilerParams(dimension_semantics=("parallel",)),
    )(emb, hid2, cell2, encf, *weights)

    nc, ns, nm, nz = head_sizes
    o_color = slab[:, 0:nc]
    o_shape = slab[:, nc:nc + ns]
    o_mat = slab[:, nc + ns:nc + ns + nm]
    o_size = slab[:, nc + ns + nm:nc + ns + nm + nz]
    h_new = slab[:, HP:HP + H]
    c_new = slab[:, HP + H:HP + 2 * H]
    attn_w = slab[:, HP + 2 * H:HP + 2 * H + L]

    # PyTorch-parity shapes
    return (o_color, o_shape, o_mat, o_size,
            h_new.reshape(1, B, H), c_new.reshape(1, B, H),
            attn_w.reshape(B, 1, L))


def reference_forward(params, ic, ish, isz, im, hidden, cell_state, enc):
    """Pure-JAX reference mirroring the PyTorch forward (eval mode)."""
    B, L, H = enc.shape
    emb = jnp.concatenate([params['emb_color'][ic], params['emb_shape'][ish],
                           params['emb_size'][isz], params['emb_mat'][im]], axis=-1)
    hid = hidden.reshape(B, H) @ params['w_lin_hidden'].T + params['b_lin_hidden']
    enc_l = enc @ params['w_lin_all'].T + params['b_lin_all']
    align = jnp.tanh(hid[:, None, :] + enc_l)
    scores = (align @ params['w_attn'].T)[..., 0] + params['b_attn'][0]
    aw = jax.nn.softmax(scores, axis=-1)
    applied = jnp.einsum('bl,blh->bh', aw, enc_l)
    x = emb + applied
    gates = x @ params['w_ih'].T + params['b_ih'] + hid @ params['w_hh'].T + params['b_hh']
    i_g = jax.nn.sigmoid(gates[:, :H]); f_g = jax.nn.sigmoid(gates[:, H:2 * H])
    g_g = jnp.tanh(gates[:, 2 * H:3 * H]); o_g = jax.nn.sigmoid(gates[:, 3 * H:])
    c = f_g * cell_state.reshape(B, H) + i_g * g_g
    h = o_g * jnp.tanh(c)
    ls = lambda w, b: jax.nn.log_softmax(h @ w.T + b, axis=-1)
    return (ls(params['w_out_color'], params['b_out_color']),
            ls(params['w_out_shape'], params['b_out_shape']),
            ls(params['w_out_mat'], params['b_out_mat']),
            ls(params['w_out_size'], params['b_out_size']),
            h.reshape(1, B, H), c.reshape(1, B, H), aw.reshape(B, 1, L))


if __name__ == "__main__":
    B, L, H = 8, 8, 32
    n_color, n_shape, n_mat, n_size = 6, 4, 3, 3
    n_emb = 20

    key = jax.random.PRNGKey(0)
    k_par, k_ic, k_is, k_iz, k_im, k_h, k_c, k_e = jax.random.split(key, 8)

    params = init_params(k_par, H, n_color, n_shape, n_mat, n_size, n_emb)

    input_color = jax.random.randint(k_ic, (B,), 0, n_emb, dtype=jnp.int32)
    input_shape = jax.random.randint(k_is, (B,), 0, n_emb, dtype=jnp.int32)
    input_size = jax.random.randint(k_iz, (B,), 0, n_emb, dtype=jnp.int32)
    input_mat = jax.random.randint(k_im, (B,), 0, n_emb, dtype=jnp.int32)
    hidden = jax.random.normal(k_h, (1, B, H), dtype=jnp.float32)
    cell_state = jax.random.normal(k_c, (1, B, H), dtype=jnp.float32)
    encoder_outputs = jax.random.normal(k_e, (B, L, H), dtype=jnp.float32)

    outs = attn_decoder_forward(params, input_color, input_shape, input_size, input_mat,
                                hidden, cell_state, encoder_outputs)
    outs = jax.block_until_ready(outs)

    refs = reference_forward(params, input_color, input_shape, input_size, input_mat,
                             hidden, cell_state, encoder_outputs)
    import numpy as np
    for o, r in zip(outs, refs):
        np.testing.assert_allclose(np.asarray(o), np.asarray(r), rtol=1e-3, atol=1e-3)

    print("KERNEL_OK")
</pallas_src>

<mosaic_0001>
module attributes {stable_mosaic.version = 11 : i64} {
  func.func @kernel(%arg0: i32, %arg1: memref<8x32xf32, #tpu.memory_space<vmem>>, %arg2: memref<8x32xf32, #tpu.memory_space<vmem>>, %arg3: memref<8x32xf32, #tpu.memory_space<vmem>>, %arg4: memref<64x32xf32, #tpu.memory_space<vmem>>, %arg5: memref<32x32xf32, #tpu.memory_space<vmem>>, %arg6: memref<1x32xf32, #tpu.memory_space<vmem>>, %arg7: memref<32x32xf32, #tpu.memory_space<vmem>>, %arg8: memref<1x32xf32, #tpu.memory_space<vmem>>, %arg9: memref<1x32xf32, #tpu.memory_space<vmem>>, %arg10: memref<64x128xf32, #tpu.memory_space<vmem>>, %arg11: memref<1x128xf32, #tpu.memory_space<vmem>>, %arg12: memref<32x128xf32, #tpu.memory_space<vmem>>, %arg13: memref<1x128xf32, #tpu.memory_space<vmem>>, %arg14: memref<8x256xf32, #tpu.memory_space<vmem>>) attributes {dimension_semantics = [#tpu.dimension_semantics<parallel>], iteration_bounds = array<i64: 1>, scalar_prefetch = 0 : i64, scratch_operands = 0 : i64, tpu.core_type = #tpu.core_type<tc>, window_params = [{transform_indices = @transform_0, window_bounds = array<i64: 8, 32>}, {transform_indices = @transform_1, window_bounds = array<i64: 8, 32>}, {transform_indices = @transform_2, window_bounds = array<i64: 8, 32>}, {transform_indices = @transform_3, window_bounds = array<i64: 64, 32>}, {pipeline_mode = #tpu.pipeline_mode<synchronous>, transform_indices = @transform_4, window_bounds = array<i64: 32, 32>}, {pipeline_mode = #tpu.pipeline_mode<synchronous>, transform_indices = @transform_5, window_bounds = array<i64: 1, 32>}, {pipeline_mode = #tpu.pipeline_mode<synchronous>, transform_indices = @transform_6, window_bounds = array<i64: 32, 32>}, {pipeline_mode = #tpu.pipeline_mode<synchronous>, transform_indices = @transform_7, window_bounds = array<i64: 1, 32>}, {pipeline_mode = #tpu.pipeline_mode<synchronous>, transform_indices = @transform_8, window_bounds = array<i64: 1, 32>}, {pipeline_mode = #tpu.pipeline_mode<synchronous>, transform_indices = @transform_9, window_bounds = array<i64: 64, 128>}, {pipeline_mode = #tpu.pipeline_mode<synchronous>, transform_indices = @transform_10, window_bounds = array<i64: 1, 128>}, {pipeline_mode = #tpu.pipeline_mode<synchronous>, transform_indices = @transform_11, window_bounds = array<i64: 32, 128>}, {pipeline_mode = #tpu.pipeline_mode<synchronous>, transform_indices = @transform_12, window_bounds = array<i64: 1, 128>}, {transform_indices = @transform_13, window_bounds = array<i64: 8, 256>}]} {
    %c0 = arith.constant 0 : index
    %c0_0 = arith.constant 0 : index
    %0 = vector.load %arg1[%c0, %c0_0] : memref<8x32xf32, #tpu.memory_space<vmem>>, vector<8x32xf32>
    %c0_1 = arith.constant 0 : index
    %c0_2 = arith.constant 0 : index
    %1 = vector.load %arg2[%c0_1, %c0_2] : memref<8x32xf32, #tpu.memory_space<vmem>>, vector<8x32xf32>
    %c0_3 = arith.constant 0 : index
    %c0_4 = arith.constant 0 : index
    %2 = vector.load %arg3[%c0_3, %c0_4] : memref<8x32xf32, #tpu.memory_space<vmem>>, vector<8x32xf32>
    %c0_5 = arith.constant 0 : index
    %c0_6 = arith.constant 0 : index
    %3 = vector.load %arg4[%c0_5, %c0_6] : memref<64x32xf32, #tpu.memory_space<vmem>>, vector<64x32xf32>
    %c0_7 = arith.constant 0 : index
    %c0_8 = arith.constant 0 : index
    %4 = vector.load %arg5[%c0_7, %c0_8] : memref<32x32xf32, #tpu.memory_space<vmem>>, vector<32x32xf32>
    %cst = arith.constant dense<0.000000e+00> : vector<8x32xf32>
    %5 = tpu.matmul %1, %4, %cst {dimension_numbers = #tpu.dot_dimension_numbers<[1], [0], [0], [1], [0, 0, 1, 1], [], []>} : vector<8x32xf32>, vector<32x32xf32>, vector<8x32xf32> -> vector<8x32xf32>
    %c0_9 = arith.constant 0 : index
    %c0_10 = arith.constant 0 : index
    %6 = vector.load %arg6[%c0_9, %c0_10] : memref<1x32xf32, #tpu.memory_space<vmem>>, vector<1x32xf32>
    %7 = vector.broadcast %6 : vector<1x32xf32> to vector<8x32xf32>
    %8 = arith.addf %5, %7 : vector<8x32xf32>
    %c0_11 = arith.constant 0 : index
    %c0_12 = arith.constant 0 : index
    %9 = vector.load %arg7[%c0_11, %c0_12] : memref<32x32xf32, #tpu.memory_space<vmem>>, vector<32x32xf32>
    %cst_13 = arith.constant dense<0.000000e+00> : vector<64x32xf32>
    %10 = tpu.matmul %3, %9, %cst_13 {dimension_numbers = #tpu.dot_dimension_numbers<[1], [0], [0], [1], [0, 0, 1, 1], [], []>} : vector<64x32xf32>, vector<32x32xf32>, vector<64x32xf32> -> vector<64x32xf32>
    %c0_14 = arith.constant 0 : index
    %c0_15 = arith.constant 0 : index
    %11 = vector.load %arg8[%c0_14, %c0_15] : memref<1x32xf32, #tpu.memory_space<vmem>>, vector<1x32xf32>
    %12 = vector.broadcast %11 : vector<1x32xf32> to vector<64x32xf32>
    %13 = arith.addf %10, %12 : vector<64x32xf32>
    %14 = vector.shape_cast %13 : vector<64x32xf32> to vector<8x8x32xf32>
    %15 = vector.shape_cast %8 : vector<8x32xf32> to vector<8x1x32xf32>
    %16 = vector.broadcast %15 : vector<8x1x32xf32> to vector<8x8x32xf32>
    %17 = arith.addf %16, %14 : vector<8x8x32xf32>
    %18 = math.tanh %17 : vector<8x8x32xf32>
    %c0_16 = arith.constant 0 : index
    %c0_17 = arith.constant 0 : index
    %19 = vector.load %arg9[%c0_16, %c0_17] : memref<1x32xf32, #tpu.memory_space<vmem>>, vector<1x32xf32>
    %20 = vector.shape_cast %19 : vector<1x32xf32> to vector<1x1x32xf32>
    %21 = vector.broadcast %20 : vector<1x1x32xf32> to vector<8x8x32xf32>
    %22 = arith.mulf %18, %21 : vector<8x8x32xf32>
    %cst_18 = arith.constant dense<0.000000e+00> : vector<8x8xf32>
    %23 = vector.multi_reduction <add>, %22, %cst_18 [2] : vector<8x8x32xf32> to vector<8x8xf32>
    %cst_19 = arith.constant dense<0xFF800000> : vector<8xf32>
    %24 = vector.multi_reduction <maximumf>, %23, %cst_19 [1] : vector<8x8xf32> to vector<8xf32>
    %25 = vector.shape_cast %24 : vector<8xf32> to vector<8x1xf32>
    %26 = vector.broadcast %25 : vector<8x1xf32> to vector<8x8xf32>
    %27 = arith.subf %23, %26 : vector<8x8xf32>
    %28 = math.exp %27 : vector<8x8xf32>
    %cst_20 = arith.constant dense<0.000000e+00> : vector<8xf32>
    %29 = vector.multi_reduction <add>, %28, %cst_20 [1] : vector<8x8xf32> to vector<8xf32>
    %30 = vector.shape_cast %29 : vector<8xf32> to vector<8x1xf32>
    %31 = vector.broadcast %30 : vector<8x1xf32> to vector<8x8xf32>
    %32 = arith.divf %28, %31 : vector<8x8xf32>
    %33 = vector.shape_cast %32 : vector<8x8xf32> to vector<8x8x1xf32>
    %34 = vector.broadcast %33 : vector<8x8x1xf32> to vector<8x8x32xf32>
    %35 = arith.mulf %34, %14 : vector<8x8x32xf32>
    %cst_21 = arith.constant dense<0.000000e+00> : vector<8x32xf32>
    %36 = vector.multi_reduction <add>, %35, %cst_21 [1] : vector<8x8x32xf32> to vector<8x32xf32>
    %37 = arith.addf %0, %36 : vector<8x32xf32>
    %38 = tpu.concatenate %37, %8 in 1 : vector<8x32xf32>, vector<8x32xf32> -> vector<8x64xf32>
    %c0_22 = arith.constant 0 : index
    %c0_23 = arith.constant 0 : index
    %39 = vector.load %arg10[%c0_22, %c0_23] : memref<64x128xf32, #tpu.memory_space<vmem>>, vector<64x128xf32>
    %cst_24 = arith.constant dense<0.000000e+00> : vector<8x128xf32>
    %40 = tpu.matmul %38, %39, %cst_24 {dimension_numbers = #tpu.dot_dimension_numbers<[1], [0], [0], [1], [0, 0, 1, 1], [], []>} : vector<8x64xf32>, vector<64x128xf32>, vector<8x128xf32> -> vector<8x128xf32>
    %c0_25 = arith.constant 0 : index
    %c0_26 = arith.constant 0 : index
    %41 = vector.load %arg11[%c0_25, %c0_26] : memref<1x128xf32, #tpu.memory_space<vmem>>, vector<1x128xf32>
    %42 = vector.broadcast %41 : vector<1x128xf32> to vector<8x128xf32>
    %43 = arith.addf %40, %42 : vector<8x128xf32>
    %44 = vector.extract_strided_slice %43 {offsets = [0, 0], sizes = [8, 32], strides = [1, 1]} : vector<8x128xf32> to vector<8x32xf32>
    %45 = arith.negf %44 : vector<8x32xf32>
    %46 = math.exp %45 : vector<8x32xf32>
    %cst_27 = arith.constant 1.000000e+00 : f32
    %47 = vector.broadcast %cst_27 : f32 to vector<8x32xf32>
    %48 = arith.addf %47, %46 : vector<8x32xf32>
    %49 = arith.divf %47, %48 : vector<8x32xf32>
    %50 = vector.extract_strided_slice %43 {offsets = [0, 32], sizes = [8, 32], strides = [1, 1]} : vector<8x128xf32> to vector<8x32xf32>
    %51 = arith.negf %50 : vector<8x32xf32>
    %52 = math.exp %51 : vector<8x32xf32>
    %cst_28 = arith.constant 1.000000e+00 : f32
    %53 = vector.broadcast %cst_28 : f32 to vector<8x32xf32>
    %54 = arith.addf %53, %52 : vector<8x32xf32>
    %55 = arith.divf %53, %54 : vector<8x32xf32>
    %56 = vector.extract_strided_slice %43 {offsets = [0, 64], sizes = [8, 32], strides = [1, 1]} : vector<8x128xf32> to vector<8x32xf32>
    %57 = math.tanh %56 : vector<8x32xf32>
    %58 = vector.extract_strided_slice %43 {offsets = [0, 96], sizes = [8, 32], strides = [1, 1]} : vector<8x128xf32> to vector<8x32xf32>
    %59 = arith.negf %58 : vector<8x32xf32>
    %60 = math.exp %59 : vector<8x32xf32>
    %cst_29 = arith.constant 1.000000e+00 : f32
    %61 = vector.broadcast %cst_29 : f32 to vector<8x32xf32>
    %62 = arith.addf %61, %60 : vector<8x32xf32>
    %63 = arith.divf %61, %62 : vector<8x32xf32>
    %64 = arith.mulf %55, %2 : vector<8x32xf32>
    %65 = arith.mulf %49, %57 : vector<8x32xf32>
    %66 = arith.addf %64, %65 : vector<8x32xf32>
    %67 = math.tanh %66 : vector<8x32xf32>
    %68 = arith.mulf %63, %67 : vector<8x32xf32>
    %c0_30 = arith.constant 0 : index
    %c0_31 = arith.constant 0 : index
    %69 = vector.load %arg12[%c0_30, %c0_31] : memref<32x128xf32, #tpu.memory_space<vmem>>, vector<32x128xf32>
    %cst_32 = arith.constant dense<0.000000e+00> : vector<8x128xf32>
    %70 = tpu.matmul %68, %69, %cst_32 {dimension_numbers = #tpu.dot_dimension_numbers<[1], [0], [0], [1], [0, 0, 1, 1], [], []>} : vector<8x32xf32>, vector<32x128xf32>, vector<8x128xf32> -> vector<8x128xf32>
    %c0_33 = arith.constant 0 : index
    %c0_34 = arith.constant 0 : index
    %71 = vector.load %arg13[%c0_33, %c0_34] : memref<1x128xf32, #tpu.memory_space<vmem>>, vector<1x128xf32>
    %72 = vector.broadcast %71 : vector<1x128xf32> to vector<8x128xf32>
    %73 = arith.addf %70, %72 : vector<8x128xf32>
    %74 = tpu.iota {dimensions = array<i32: 1>} : vector<8x128xi32>
    %cst_35 = arith.constant 0.000000e+00 : f32
    %75 = vector.broadcast %cst_35 : f32 to vector<8x128xf32>
    %c0_i32 = arith.constant 0 : i32
    %76 = vector.broadcast %c0_i32 : i32 to vector<8x128xi32>
    %77 = arith.cmpi sge, %74, %76 : vector<8x128xi32>
    %c6_i32 = arith.constant 6 : i32
    %78 = vector.broadcast %c6_i32 : i32 to vector<8x128xi32>
    %79 = arith.cmpi slt, %74, %78 : vector<8x128xi32>
    %80 = arith.andi %77, %79 : vector<8x128xi1>
    %cst_36 = arith.constant 0xFF800000 : f32
    %81 = vector.broadcast %cst_36 : f32 to vector<8x128xf32>
    %82 = arith.select %80, %73, %81 : vector<8x128xi1>, vector<8x128xf32>
    %cst_37 = arith.constant dense<0xFF800000> : vector<8xf32>
    %83 = vector.multi_reduction <maximumf>, %82, %cst_37 [1] : vector<8x128xf32> to vector<8xf32>
    %84 = vector.shape_cast %83 : vector<8xf32> to vector<8x1xf32>
    %85 = vector.broadcast %84 : vector<8x1xf32> to vector<8x128xf32>
    %86 = arith.subf %82, %85 : vector<8x128xf32>
    %87 = math.exp %86 : vector<8x128xf32>
    %cst_38 = arith.constant dense<0.000000e+00> : vector<8xf32>
    %88 = vector.multi_reduction <add>, %87, %cst_38 [1] : vector<8x128xf32> to vector<8xf32>
    %89 = vector.shape_cast %88 : vector<8xf32> to vector<8x1xf32>
    %90 = math.log %89 : vector<8x1xf32>
    %91 = vector.broadcast %84 : vector<8x1xf32> to vector<8x128xf32>
    %92 = arith.subf %73, %91 : vector<8x128xf32>
    %93 = vector.broadcast %90 : vector<8x1xf32> to vector<8x128xf32>
    %94 = arith.subf %92, %93 : vector<8x128xf32>
    %95 = arith.select %80, %94, %75 : vector<8x128xi1>, vector<8x128xf32>
    %c6_i32_39 = arith.constant 6 : i32
    %96 = vector.broadcast %c6_i32_39 : i32 to vector<8x128xi32>
    %97 = arith.cmpi sge, %74, %96 : vector<8x128xi32>
    %c10_i32 = arith.constant 10 : i32
    %98 = vector.broadcast %c10_i32 : i32 to vector<8x128xi32>
    %99 = arith.cmpi slt, %74, %98 : vector<8x128xi32>
    %100 = arith.andi %97, %99 : vector<8x128xi1>
    %cst_40 = arith.constant 0xFF800000 : f32
    %101 = vector.broadcast %cst_40 : f32 to vector<8x128xf32>
    %102 = arith.select %100, %73, %101 : vector<8x128xi1>, vector<8x128xf32>
    %cst_41 = arith.constant dense<0xFF800000> : vector<8xf32>
    %103 = vector.multi_reduction <maximumf>, %102, %cst_41 [1] : vector<8x128xf32> to vector<8xf32>
    %104 = vector.shape_cast %103 : vector<8xf32> to vector<8x1xf32>
    %105 = vector.broadcast %104 : vector<8x1xf32> to vector<8x128xf32>
    %106 = arith.subf %102, %105 : vector<8x128xf32>
    %107 = math.exp %106 : vector<8x128xf32>
    %cst_42 = arith.constant dense<0.000000e+00> : vector<8xf32>
    %108 = vector.multi_reduction <add>, %107, %cst_42 [1] : vector<8x128xf32> to vector<8xf32>
    %109 = vector.shape_cast %108 : vector<8xf32> to vector<8x1xf32>
    %110 = math.log %109 : vector<8x1xf32>
    %111 = vector.broadcast %104 : vector<8x1xf32> to vector<8x128xf32>
    %112 = arith.subf %73, %111 : vector<8x128xf32>
    %113 = vector.broadcast %110 : vector<8x1xf32> to vector<8x128xf32>
    %114 = arith.subf %112, %113 : vector<8x128xf32>
    %115 = arith.select %100, %114, %95 : vector<8x128xi1>, vector<8x128xf32>
    %c10_i32_43 = arith.constant 10 : i32
    %116 = vector.broadcast %c10_i32_43 : i32 to vector<8x128xi32>
    %117 = arith.cmpi sge, %74, %116 : vector<8x128xi32>
    %c13_i32 = arith.constant 13 : i32
    %118 = vector.broadcast %c13_i32 : i32 to vector<8x128xi32>
    %119 = arith.cmpi slt, %74, %118 : vector<8x128xi32>
    %120 = arith.andi %117, %119 : vector<8x128xi1>
    %cst_44 = arith.constant 0xFF800000 : f32
    %121 = vector.broadcast %cst_44 : f32 to vector<8x128xf32>
    %122 = arith.select %120, %73, %121 : vector<8x128xi1>, vector<8x128xf32>
    %cst_45 = arith.constant dense<0xFF800000> : vector<8xf32>
    %123 = vector.multi_reduction <maximumf>, %122, %cst_45 [1] : vector<8x128xf32> to vector<8xf32>
    %124 = vector.shape_cast %123 : vector<8xf32> to vector<8x1xf32>
    %125 = vector.broadcast %124 : vector<8x1xf32> to vector<8x128xf32>
    %126 = arith.subf %122, %125 : vector<8x128xf32>
    %127 = math.exp %126 : vector<8x128xf32>
    %cst_46 = arith.constant dense<0.000000e+00> : vector<8xf32>
    %128 = vector.multi_reduction <add>, %127, %cst_46 [1] : vector<8x128xf32> to vector<8xf32>
    %129 = vector.shape_cast %128 : vector<8xf32> to vector<8x1xf32>
    %130 = math.log %129 : vector<8x1xf32>
    %131 = vector.broadcast %124 : vector<8x1xf32> to vector<8x128xf32>
    %132 = arith.subf %73, %131 : vector<8x128xf32>
    %133 = vector.broadcast %130 : vector<8x1xf32> to vector<8x128xf32>
    %134 = arith.subf %132, %133 : vector<8x128xf32>
    %135 = arith.select %120, %134, %115 : vector<8x128xi1>, vector<8x128xf32>
    %c13_i32_47 = arith.constant 13 : i32
    %136 = vector.broadcast %c13_i32_47 : i32 to vector<8x128xi32>
    %137 = arith.cmpi sge, %74, %136 : vector<8x128xi32>
    %c16_i32 = arith.constant 16 : i32
    %138 = vector.broadcast %c16_i32 : i32 to vector<8x128xi32>
    %139 = arith.cmpi slt, %74, %138 : vector<8x128xi32>
    %140 = arith.andi %137, %139 : vector<8x128xi1>
    %cst_48 = arith.constant 0xFF800000 : f32
    %141 = vector.broadcast %cst_48 : f32 to vector<8x128xf32>
    %142 = arith.select %140, %73, %141 : vector<8x128xi1>, vector<8x128xf32>
    %cst_49 = arith.constant dense<0xFF800000> : vector<8xf32>
    %143 = vector.multi_reduction <maximumf>, %142, %cst_49 [1] : vector<8x128xf32> to vector<8xf32>
    %144 = vector.shape_cast %143 : vector<8xf32> to vector<8x1xf32>
    %145 = vector.broadcast %144 : vector<8x1xf32> to vector<8x128xf32>
    %146 = arith.subf %142, %145 : vector<8x128xf32>
    %147 = math.exp %146 : vector<8x128xf32>
    %cst_50 = arith.constant dense<0.000000e+00> : vector<8xf32>
    %148 = vector.multi_reduction <add>, %147, %cst_50 [1] : vector<8x128xf32> to vector<8xf32>
    %149 = vector.shape_cast %148 : vector<8xf32> to vector<8x1xf32>
    %150 = math.log %149 : vector<8x1xf32>
    %151 = vector.broadcast %144 : vector<8x1xf32> to vector<8x128xf32>
    %152 = arith.subf %73, %151 : vector<8x128xf32>
    %153 = vector.broadcast %150 : vector<8x1xf32> to vector<8x128xf32>
    %154 = arith.subf %152, %153 : vector<8x128xf32>
    %155 = arith.select %140, %154, %135 : vector<8x128xi1>, vector<8x128xf32>
    %cst_51 = arith.constant 0.000000e+00 : f32
    %156 = vector.broadcast %cst_51 : f32 to vector<8x56xf32>
    %157 = tpu.concatenate %155, %68, %66, %32, %156 in 1 : vector<8x128xf32>, vector<8x32xf32>, vector<8x32xf32>, vector<8x8xf32>, vector<8x56xf32> -> vector<8x256xf32>
    %c0_52 = arith.constant 0 : index
    %c0_53 = arith.constant 0 : index
    %158 = vector.load %arg14[%c0_52, %c0_53] : memref<8x256xf32, #tpu.memory_space<vmem>>, vector<8x256xf32>
    tpu.vector_store %arg14[%c0_52, %c0_53], %157 {strides = array<i32>} : memref<8x256xf32, #tpu.memory_space<vmem>>, vector<8x256xf32>,
    return
  }
  func.func @transform_0(%arg0: i32) -> (i32, i32) {
    %c0_i32 = arith.constant 0 : i32
    %c0_i32_0 = arith.constant 0 : i32
    return %arg0, %c0_i32 : i32, i32
  }
  func.func @transform_1(%arg0: i32) -> (i32, i32) {
    %c0_i32 = arith.constant 0 : i32
    %c0_i32_0 = arith.constant 0 : i32
    return %arg0, %c0_i32 : i32, i32
  }
  func.func @transform_2(%arg0: i32) -> (i32, i32) {
    %c0_i32 = arith.constant 0 : i32
    %c0_i32_0 = arith.constant 0 : i32
    return %arg0, %c0_i32 : i32, i32
  }
  func.func @transform_3(%arg0: i32) -> (i32, i32) {
    %c0_i32 = arith.constant 0 : i32
    %c0_i32_0 = arith.constant 0 : i32
    return %arg0, %c0_i32 : i32, i32
  }
  func.func @transform_4(%arg0: i32) -> (i32, i32) {
    %c0_i32 = arith.constant 0 : i32
    %c0_i32_0 = arith.constant 0 : i32
    %c0_i32_1 = arith.constant 0 : i32
    return %c0_i32, %c0_i32_0 : i32, i32
  }
  func.func @transform_5(%arg0: i32) -> (i32, i32) {
    %c0_i32 = arith.constant 0 : i32
    %c0_i32_0 = arith.constant 0 : i32
    %c0_i32_1 = arith.constant 0 : i32
    return %c0_i32, %c0_i32_0 : i32, i32
  }
  func.func @transform_6(%arg0: i32) -> (i32, i32) {
    %c0_i32 = arith.constant 0 : i32
    %c0_i32_0 = arith.constant 0 : i32
    %c0_i32_1 = arith.constant 0 : i32
    return %c0_i32, %c0_i32_0 : i32, i32
  }
  func.func @transform_7(%arg0: i32) -> (i32, i32) {
    %c0_i32 = arith.constant 0 : i32
    %c0_i32_0 = arith.constant 0 : i32
    %c0_i32_1 = arith.constant 0 : i32
    return %c0_i32, %c0_i32_0 : i32, i32
  }
  func.func @transform_8(%arg0: i32) -> (i32, i32) {
    %c0_i32 = arith.constant 0 : i32
    %c0_i32_0 = arith.constant 0 : i32
    %c0_i32_1 = arith.constant 0 : i32
    return %c0_i32, %c0_i32_0 : i32, i32
  }
  func.func @transform_9(%arg0: i32) -> (i32, i32) {
    %c0_i32 = arith.constant 0 : i32
    %c0_i32_0 = arith.constant 0 : i32
    %c0_i32_1 = arith.constant 0 : i32
    return %c0_i32, %c0_i32_0 : i32, i32
  }
  func.func @transform_10(%arg0: i32) -> (i32, i32) {
    %c0_i32 = arith.constant 0 : i32
    %c0_i32_0 = arith.constant 0 : i32
    %c0_i32_1 = arith.constant 0 : i32
    return %c0_i32, %c0_i32_0 : i32, i32
  }
  func.func @transform_11(%arg0: i32) -> (i32, i32) {
    %c0_i32 = arith.constant 0 : i32
    %c0_i32_0 = arith.constant 0 : i32
    %c0_i32_1 = arith.constant 0 : i32
    return %c0_i32, %c0_i32_0 : i32, i32
  }
  func.func @transform_12(%arg0: i32) -> (i32, i32) {
    %c0_i32 = arith.constant 0 : i32
    %c0_i32_0 = arith.constant 0 : i32
    %c0_i32_1 = arith.constant 0 : i32
    return %c0_i32, %c0_i32_0 : i32, i32
  }
  func.func @transform_13(%arg0: i32) -> (i32, i32) {
    %c0_i32 = arith.constant 0 : i32
    %c0_i32_0 = arith.constant 0 : i32
    return %arg0, %c0_i32 : i32, i32
  }
}

</mosaic_0001>

<llo_original>
// kernel: tpu_custom_call.1
$region0: #{tpu_custom_call.1}
  #allocation0 [shape = 'u32[]', space=smem, size = 0x4, offset = 0x4, fixed_abs, tag = 'smem constant byte address 0x4 - core index']
  #allocation1 [shape = 'u32[144,128]{1,0:T(1,128)}', space=vmem, size = 0x12000, scoped, tag = 'internal scratch']
  %s0 = inlined_call_operand.hbm [shape: f32[8,32], index: 0, kind: input, shape index: {}]
  %s1 = inlined_call_operand.hbm [shape: f32[8,32], index: 1, kind: input, shape index: {}]
  %s2 = inlined_call_operand.hbm [shape: f32[8,32], index: 2, kind: input, shape index: {}]
  %s3 = inlined_call_operand.vmem [shape: f32[64,32], index: 3, kind: input, shape index: {}]
  %s4 = inlined_call_operand.vmem [shape: f32[32,32], index: 4, kind: input, shape index: {}]
  %s5 = inlined_call_operand.vmem [shape: f32[1,32], index: 5, kind: input, shape index: {}]
  %s6 = inlined_call_operand.hbm [shape: f32[32,32], index: 6, kind: input, shape index: {}]
  %s7 = inlined_call_operand.vmem [shape: f32[1,32], index: 7, kind: input, shape index: {}]
  %s8 = inlined_call_operand.hbm [shape: f32[1,32], index: 8, kind: input, shape index: {}]
  %s9 = inlined_call_operand.vmem [shape: f32[64,128], index: 9, kind: input, shape index: {}]
  %s10 = inlined_call_operand.vmem [shape: f32[1,128], index: 10, kind: input, shape index: {}]
  %s11 = inlined_call_operand.vmem [shape: f32[32,128], index: 11, kind: input, shape index: {}]
  %s12 = inlined_call_operand.vmem [shape: f32[1,128], index: 12, kind: input, shape index: {}]
  %s13 = inlined_call_operand.hbm [shape: f32[8,256], index: 13, kind: output, shape index: {}]
  %s14 = sld [smem:[#allocation0]]
  $region82: #{tpu_custom_call.1} parent=0
    _
  %s16 = ssub.s32 1, %s14
  %s17 = scalar_select 0, %s16, %s14
  $region1: #{tpu_custom_call.1} parent=0
    #allocation2 [shape = 'u8[4096]{0}', space=vmem, size = 0x1000, scoped, tag = 'input window, operand 0, single buffered']
    #allocation3 [shape = 's32[1]{0}', space=sflag, size = 0x4, scoped, tag = 'scoped memory for tpu_custom_call.1']
    #allocation4 [shape = 's32[1]{0}', space=sflag, size = 0x4, scoped, tag = 'scoped memory for tpu_custom_call.1']
    #allocation5 [shape = 'u8[4096]{0}', space=vmem, size = 0x1000, scoped, tag = 'input window, operand 1, single buffered']
    #allocation6 [shape = 's32[1]{0}', space=sflag, size = 0x4, scoped, tag = 'scoped memory for tpu_custom_call.1']
    #allocation7 [shape = 'u8[4096]{0}', space=vmem, size = 0x1000, scoped, tag = 'input window, operand 2, single buffered']
    #allocation8 [shape = 'u8[16384]{0}', space=vmem, size = 0x4000, scoped, tag = 'input window, operand 6, single buffered']
    #allocation9 [shape = 's32[1]{0}', space=sflag, size = 0x4, scoped, tag = 'scoped memory for tpu_custom_call.1']
    #allocation10 [shape = 'u8[512]{0}', space=vmem, size = 0x400, scoped, tag = 'input window, operand 8, single buffered']
    #allocation11 [shape = 'u8[8192]{0}', space=vmem, size = 0x2000, scoped, tag = 'output window, operand 0, single buffered']
    %18 = vsyncpa [#allocation3], 0
    %19 = vsyncpa [#allocation6], 0
    %20 = vsyncpa [#allocation9], 0
    %21 = vsyncpa [#allocation4], 0
    // Predicated region
    $region2: #{tpu_custom_call.1} parent=1 // pred_check
      _
    $region3: #{tpu_custom_call.1} parent=1 // pred_check_branch
      %23 = sbr.rel (0) target = $region5
    $region4: #{tpu_custom_call.1} parent=1 // pred_region
      %s25 = ssub.s32 128, 128
      %26 = vsyncadd [#allocation3], %s25
      %s28 = sshll.u32 [#allocation2], 4
      %s29 = int_to_ptr.vmem [resolvable:$true] %s28
      %31 = dma.hbm_to_vmem [thread:$0]  %s0, 128, %s29, [#allocation3]
    $region5: #{tpu_custom_call.1} parent=1 // pred_fallthru
      _
    // Predicated region
    $region6: #{tpu_custom_call.1} parent=1 // pred_check
      _
    $region7: #{tpu_custom_call.1} parent=1 // pred_check_branch
      %33 = sbr.rel (0) target = $region9
    $region8: #{tpu_custom_call.1} parent=1 // pred_region
      %s35 = ssub.s32 128, 128
      %36 = vsyncadd [#allocation6], %s35
      %s38 = sshll.u32 [#allocation5], 4
      %s39 = int_to_ptr.vmem [resolvable:$true] %s38
      %41 = dma.hbm_to_vmem [thread:$0]  %s1, 128, %s39, [#allocation6]
    $region9: #{tpu_custom_call.1} parent=1 // pred_fallthru
      _
    // Predicated region
    $region10: #{tpu_custom_call.1} parent=1 // pred_check
      _
    $region11: #{tpu_custom_call.1} parent=1 // pred_check_branch
      %43 = sbr.rel (0) target = $region13
    $region12: #{tpu_custom_call.1} parent=1 // pred_region
      %s45 = ssub.s32 128, 128
      %46 = vsyncadd [#allocation6], %s45
      %s48 = sshll.u32 [#allocation7], 4
      %s49 = int_to_ptr.vmem [resolvable:$true] %s48
      %51 = dma.hbm_to_vmem [thread:$0]  %s2, 128, %s49, [#allocation6]
    $region13: #{tpu_custom_call.1} parent=1 // pred_fallthru
      _
    // Predicated region
    $region14: #{tpu_custom_call.1} parent=1 // pred_check
      _
    $region15: #{tpu_custom_call.1} parent=1 // pred_check_branch
      %53 = sbr.rel (0) target = $region17
    $region16: #{tpu_custom_call.1} parent=1 // pred_region
      _
    $region17: #{tpu_custom_call.1} parent=1 // pred_fallthru
      _
    // Predicated region
    $region18: #{tpu_custom_call.1} parent=1 // pred_check
      _
    $region19: #{tpu_custom_call.1} parent=1 // pred_check_branch
      %55 = sbr.rel (0) target = $region21
    $region20: #{tpu_custom_call.1} parent=1 // pred_region
      _
    $region21: #{tpu_custom_call.1} parent=1 // pred_fallthru
      _
    // Predicated region
    $region22: #{tpu_custom_call.1} parent=1 // pred_check
      _
    $region23: #{tpu_custom_call.1} parent=1 // pred_check_branch
      %57 = sbr.rel (0) target = $region25
    $region24: #{tpu_custom_call.1} parent=1 // pred_region
      _
    $region25: #{tpu_custom_call.1} parent=1 // pred_fallthru
      _
    // Predicated region
    $region26: #{tpu_custom_call.1} parent=1 // pred_check
      _
    $region27: #{tpu_custom_call.1} parent=1 // pred_check_branch
      %59 = sbr.rel (0) target = $region29
    $region28: #{tpu_custom_call.1} parent=1 // pred_region
      %s61 = ssub.s32 512, 512
      %62 = vsyncadd [#allocation9], %s61
      %s63 = sshll.u32 [#allocation8], 4
      %s64 = int_to_ptr.vmem [resolvable:$true] %s63
      %69 = dma.hbm_to_vmem [thread:$0]  %s6, 512, %s64, [#allocation9], 128, 128, 8
    $region29: #{tpu_custom_call.1} parent=1 // pred_fallthru
      _
    // Predicated region
    $region30: #{tpu_custom_call.1} parent=1 // pred_check
      _
    $region31: #{tpu_custom_call.1} parent=1 // pred_check_branch
      %71 = sbr.rel (0) target = $region33
    $region32: #{tpu_custom_call.1} parent=1 // pred_region
      _
    $region33: #{tpu_custom_call.1} parent=1 // pred_fallthru
      _
    // Predicated region
    $region34: #{tpu_custom_call.1} parent=1 // pred_check
      _
    $region35: #{tpu_custom_call.1} parent=1 // pred_check_branch
      %73 = sbr.rel (0) target = $region37
    $region36: #{tpu_custom_call.1} parent=1 // pred_region
      %s75 = ssub.s32 16, 16
      %76 = vsyncadd [#allocation9], %s75
      %s78 = sshll.u32 [#allocation10], 4
      %s79 = int_to_ptr.vmem [resolvable:$true] %s78
      %81 = dma.hbm_to_vmem [thread:$0]  %s8, 16, %s79, [#allocation9]
    $region37: #{tpu_custom_call.1} parent=1 // pred_fallthru
      _
    // Predicated region
    $region38: #{tpu_custom_call.1} parent=1 // pred_check
      _
    $region39: #{tpu_custom_call.1} parent=1 // pred_check_branch
      %83 = sbr.rel (0) target = $region41
    $region40: #{tpu_custom_call.1} parent=1 // pred_region
      _
    $region41: #{tpu_custom_call.1} parent=1 // pred_fallthru
      _
    // Predicated region
    $region42: #{tpu_custom_call.1} parent=1 // pred_check
      _
    $region43: #{tpu_custom_call.1} parent=1 // pred_check_branch
      %85 = sbr.rel (0) target = $region45
    $region44: #{tpu_custom_call.1} parent=1 // pred_region
      _
    $region45: #{tpu_custom_call.1} parent=1 // pred_fallthru
      _
    // Predicated region
    $region46: #{tpu_custom_call.1} parent=1 // pred_check
      _
    $region47: #{tpu_custom_call.1} parent=1 // pred_check_branch
      %87 = sbr.rel (0) target = $region49
    $region48: #{tpu_custom_call.1} parent=1 // pred_region
      _
    $region49: #{tpu_custom_call.1} parent=1 // pred_fallthru
      _
    // Predicated region
    $region50: #{tpu_custom_call.1} parent=1 // pred_check
      _
    $region51: #{tpu_custom_call.1} parent=1 // pred_check_branch
      %89 = sbr.rel (0) target = $region53
    $region52: #{tpu_custom_call.1} parent=1 // pred_region
      _
    $region53: #{tpu_custom_call.1} parent=1 // pred_fallthru
      _
    // Predicated region
    $region54: #{tpu_custom_call.1} parent=1 // pred_check
      _
    $region55: #{tpu_custom_call.1} parent=1 // pred_check_branch
      %91 = sbr.rel (0) target = $region57
    $region56: #{tpu_custom_call.1} parent=1 // pred_region
      %92 = dma.done [#allocation3], 128
    $region57: #{tpu_custom_call.1} parent=1 // pred_fallthru
      _
    // Predicated region
    $region58: #{tpu_custom_call.1} parent=1 // pred_check
      _
    $region59: #{tpu_custom_call.1} parent=1 // pred_check_branch
      %94 = sbr.rel (0) target = $region61
    $region60: #{tpu_custom_call.1} parent=1 // pred_region
      %95 = dma.done [#allocation6], 128
    $region61: #{tpu_custom_call.1} parent=1 // pred_fallthru
      _
    // Predicated region
    $region62: #{tpu_custom_call.1} parent=1 // pred_check
      _
    $region63: #{tpu_custom_call.1} parent=1 // pred_check_branch
      %97 = sbr.rel (0) target = $region65
    $region64: #{tpu_custom_call.1} parent=1 // pred_region
      %98 = dma.done [#allocation6], 128
    $region65: #{tpu_custom_call.1} parent=1 // pred_fallthru
      _
    // Predicated region
    $region66: #{tpu_custom_call.1} parent=1 // pred_check
      _
    $region67: #{tpu_custom_call.1} parent=1 // pred_check_branch
      %100 = sbr.rel (0) target = $region69
    $region68: #{tpu_custom_call.1} parent=1 // pred_region
      %101 = dma.done [#allocation9], 512
    $region69: #{tpu_custom_call.1} parent=1 // pred_fallthru
      _
    // Predicated region
    $region70: #{tpu_custom_call.1} parent=1 // pred_check
      _
    $region71: #{tpu_custom_call.1} parent=1 // pred_check_branch
      %103 = sbr.rel (0) target = $region73
    $region72: #{tpu_custom_call.1} parent=1 // pred_region
      %104 = dma.done [#allocation9], 16
    $region73: #{tpu_custom_call.1} parent=1 // pred_fallthru
      _
    %v105 = vld [vmem:[#allocation2] sm:$0xff]
    %v106 = vld [vmem:[#allocation5] sm:$0xff]
    %v107 = vld [vmem:[#allocation7] sm:$0xff]
    %v108 = vld [vmem:[%s3] sm:$0xff]
    %v109 = vld [vmem:[%s3 + $0x8] sm:$0xff]
    %v110 = vld [vmem:[%s3 + $0x10] sm:$0xff]
    %v111 = vld [vmem:[%s3 + $0x18] sm:$0xff]
    %v112 = vld [vmem:[%s3 + $0x20] sm:$0xff]
    %v113 = vld [vmem:[%s3 + $0x28] sm:$0xff]
    %v114 = vld [vmem:[%s3 + $0x30] sm:$0xff]
    %v115 = vld [vmem:[%s3 + $0x38] sm:$0xff]
    %v116 = vld [vmem:[%s4] sm:$0xff]
    %v117 = vld [vmem:[%s4 + $0x8] sm:$0xff]
    %v118 = vld [vmem:[%s4 + $0x10] sm:$0xff]
    %v119 = vld [vmem:[%s4 + $0x18] sm:$0xff]
    %v120 = vld [vmem:[%s5] sm:$0x1]
    %v122 = vlaneseq
    %v123 = vshrl.u32 %v122, 7
    %v124 = vsub.s32 0, %v123
    %v125 = vrot.slane %v120, %v124
    %vm127 = vcmask 261120
    %v129 = vsel %vm127, %v106, 0
    %131 = vmatprep.subr.mxu0 0.0
    %132 = vmatpush1.msra.mxu0 %v116
    %133 = vmatprep.subr.mxu0 0.0
    %134 = vmatpush1.msra.mxu0 %v117
    %135 = vmatprep.subr.mxu0 0.0
    %136 = vmatpush1.msra.mxu0 %v118
    %137 = vmatprep.subr.mxu0 0.0
    %138 = vmatpush1.msra.mxu0 %v119
    %139 = vmatprep.subr.mxu0 0.0
    %140 = vmatpush1.msra.mxu0 0.0
    %141 = vmatprep.subr.mxu0 0.0
    %142 = vmatpush1.msra.mxu0 0.0
    %143 = vmatprep.subr.mxu0 0.0
    %144 = vmatpush1.msra.mxu0 0.0
    %145 = vmatprep.subr.mxu0 0.0
    %146 = vmatpush1.msra.mxu0 0.0
    %147 = vmatprep.subr.mxu0 0.0
    %148 = vmatpush1.msra.mxu0 0.0
    %149 = vmatprep.subr.mxu0 0.0
    %150 = vmatpush1.msra.mxu0 0.0
    %151 = vmatprep.subr.mxu0 0.0
    %152 = vmatpush1.msra.mxu0 0.0
    %153 = vmatprep.subr.mxu0 0.0
    %154 = vmatpush1.msra.mxu0 0.0
    %155 = vmatprep.subr.mxu0 0.0
    %156 = vmatpush1.msra.mxu0 0.0
    %157 = vmatprep.subr.mxu0 0.0
    %158 = vmatpush1.msra.mxu0 0.0
    %159 = vmatprep.subr.mxu0 0.0
    %160 = vmatpush1.msra.mxu0 0.0
    %161 = vmatprep.subr.mxu0 0.0
    %162 = vmatpush1.msra.mxu0 0.0
    %163 = vmatprep.subr.mxu0 0.0
    %164 = vmatpush1.msra.mxu0 0.0
    %165 = vmatprep.subr.mxu0 0.0
    %166 = vmatpush1.msra.mxu0 0.0
    %167 = vmatprep.subr.mxu0 0.0
    %168 = vmatpush1.msra.mxu0 0.0
    %169 = vmatprep.subr.mxu0 0.0
    %170 = vmatpush1.msra.mxu0 0.0
    %171 = vmatprep.subr.mxu0 0.0
    %172 = vmatpush1.msra.mxu0 0.0
    %173 = vmatprep.subr.mxu0 0.0
    %174 = vmatpush1.msra.mxu0 0.0
    %175 = vmatprep.subr.mxu0 0.0
    %176 = vmatpush1.msra.mxu0 0.0
    %177 = vmatprep.subr.mxu0 0.0
    %178 = vmatpush1.msra.mxu0 0.0
    %179 = vmatprep.subr.mxu0 0.0
    %180 = vmatpush1.msra.mxu0 0.0
    %181 = vmatprep.subr.mxu0 0.0
    %182 = vmatpush1.msra.mxu0 0.0
    %183 = vmatprep.subr.mxu0 0.0
    %184 = vmatpush1.msra.mxu0 0.0
    %185 = vmatprep.subr.mxu0 0.0
    %186 = vmatpush1.msra.mxu0 0.0
    %187 = vmatprep.subr.mxu0 0.0
    %188 = vmatpush1.msra.mxu0 0.0
    %189 = vmatprep.subr.mxu0 0.0
    %190 = vmatpush1.msra.mxu0 0.0
    %191 = vmatprep.subr.mxu0 0.0
    %192 = vmatpush1.msra.mxu0 0.0
    %193 = vmatprep.subr.mxu0 0.0
    %194 = vmatpush1.msra.mxu0 0.0
    %195 = vmatprep.mubr.f32.mxu0 0.0
    %196 = vmatmul.mubr.f32.gmra.mrb[0].mxu0 %v129
    %v197 = vpop.f32.mrb[0].mxu0
    %v198 = vadd.f32 %v125, %v197
    %v199 = vpop.f32.mrb[0].mxu0
    %200 = vdwg.mxu0
    %v201 = vld [vmem:[#allocation8] sm:$0xff]
    %v202 = vld [vmem:[#allocation8 + $0x8] sm:$0xff]
    %v203 = vld [vmem:[#allocation8 + $0x10] sm:$0xff]
    %v204 = vld [vmem:[#allocation8 + $0x18] sm:$0xff]
    %v205 = vld [vmem:[%s7] sm:$0x1]
    %v207 = vlaneseq
    %v208 = vshrl.u32 %v207, 7
    %v209 = vsub.s32 0, %v208
    %v210 = vrot.slane %v205, %v209
    %v213 = vsel %vm127, %v108, 0
    %v216 = vsel %vm127, %v109, 0
    %v219 = vsel %vm127, %v110, 0
    %v222 = vsel %vm127, %v111, 0
    %v225 = vsel %vm127, %v112, 0
    %v228 = vsel %vm127, %v113, 0
    %v231 = vsel %vm127, %v114, 0
    %v234 = vsel %vm127, %v115, 0
    %236 = vmatprep.subr.mxu0 0.0
    %237 = vmatpush1.msra.mxu0 %v201
    %238 = vmatprep.subr.mxu0 0.0
    %239 = vmatpush1.msra.mxu0 %v202
    %240 = vmatprep.subr.mxu0 0.0
    %241 = vmatpush1.msra.mxu0 %v203
    %242 = vmatprep.subr.mxu0 0.0
    %243 = vmatpush1.msra.mxu0 %v204
    %244 = vmatprep.subr.mxu0 0.0
    %245 = vmatpush1.msra.mxu0 0.0
    %246 = vmatprep.subr.mxu0 0.0
    %247 = vmatpush1.msra.mxu0 0.0
    %248 = vmatprep.subr.mxu0 0.0
    %249 = vmatpush1.msra.mxu0 0.0
    %250 = vmatprep.subr.mxu0 0.0
    %251 = vmatpush1.msra.mxu0 0.0
    %252 = vmatprep.subr.mxu0 0.0
    %253 = vmatpush1.msra.mxu0 0.0
    %254 = vmatprep.subr.mxu0 0.0
    %255 = vmatpush1.msra.mxu0 0.0
    %256 = vmatprep.subr.mxu0 0.0
    %257 = vmatpush1.msra.mxu0 0.0
    %258 = vmatprep.subr.mxu0 0.0
    %259 = vmatpush1.msra.mxu0 0.0
    %260 = vmatprep.subr.mxu0 0.0
    %261 = vmatpush1.msra.mxu0 0.0
    %262 = vmatprep.subr.mxu0 0.0
    %263 = vmatpush1.msra.mxu0 0.0
    %264 = vmatprep.subr.mxu0 0.0
    %265 = vmatpush1.msra.mxu0 0.0
    %266 = vmatprep.subr.mxu0 0.0
    %267 = vmatpush1.msra.mxu0 0.0
    %268 = vmatprep.subr.mxu0 0.0
    %269 = vmatpush1.msra.mxu0 0.0
    %270 = vmatprep.subr.mxu0 0.0
    %271 = vmatpush1.msra.mxu0 0.0
    %272 = vmatprep.subr.mxu0 0.0
    %273 = vmatpush1.msra.mxu0 0.0
    %274 = vmatprep.subr.mxu0 0.0
    %275 = vmatpush1.msra.mxu0 0.0
    %276 = vmatprep.subr.mxu0 0.0
    %277 = vmatpush1.msra.mxu0 0.0
    %278 = vmatprep.subr.mxu0 0.0
    %279 = vmatpush1.msra.mxu0 0.0
    %280 = vmatprep.subr.mxu0 0.0
    %281 = vmatpush1.msra.mxu0 0.0
    %282 = vmatprep.subr.mxu0 0.0
    %283 = vmatpush1.msra.mxu0 0.0
    %284 = vmatprep.subr.mxu0 0.0
    %285 = vmatpush1.msra.mxu0 0.0
    %286 = vmatprep.subr.mxu0 0.0
    %287 = vmatpush1.msra.mxu0 0.0
    %288 = vmatprep.subr.mxu0 0.0
    %289 = vmatpush1.msra.mxu0 0.0
    %290 = vmatprep.subr.mxu0 0.0
    %291 = vmatpush1.msra.mxu0 0.0
    %292 = vmatprep.subr.mxu0 0.0
    %293 = vmatpush1.msra.mxu0 0.0
    %294 = vmatprep.subr.mxu0 0.0
    %295 = vmatpush1.msra.mxu0 0.0
    %296 = vmatprep.subr.mxu0 0.0
    %297 = vmatpush1.msra.mxu0 0.0
    %298 = vmatprep.subr.mxu0 0.0
    %299 = vmatpush1.msra.mxu0 0.0
    %300 = vmatprep.mubr.f32.mxu0 0.0
    %301 = vmatmul.mubr.f32.gmra.mrb[0].mxu0 %v213
    %v302 = vpop.f32.mrb[0].mxu0
    %v303 = vadd.f32 %v210, %v302
    %v304 = vpop.f32.mrb[0].mxu0
    %305 = vmatprep.mubr.f32.mxu0 0.0
    %306 = vmatmul.mubr.f32.gmra.mrb[0].mxu0 %v216
    %v307 = vpop.f32.mrb[0].mxu0
    %v308 = vadd.f32 %v210, %v307
    %v309 = vpop.f32.mrb[0].mxu0
    %310 = vmatprep.mubr.f32.mxu0 0.0
    %311 = vmatmul.mubr.f32.gmra.mrb[0].mxu0 %v219
    %v312 = vpop.f32.mrb[0].mxu0
    %v313 = vadd.f32 %v210, %v312
    %v314 = vpop.f32.mrb[0].mxu0
    %315 = vmatprep.mubr.f32.mxu0 0.0
    %316 = vmatmul.mubr.f32.gmra.mrb[0].mxu0 %v222
    %v317 = vpop.f32.mrb[0].mxu0
    %v318 = vadd.f32 %v210, %v317
    %v319 = vpop.f32.mrb[0].mxu0
    %320 = vmatprep.mubr.f32.mxu0 0.0
    %321 = vmatmul.mubr.f32.gmra.mrb[0].mxu0 %v225
    %v322 = vpop.f32.mrb[0].mxu0
    %v323 = vadd.f32 %v210, %v322
    %v324 = vpop.f32.mrb[0].mxu0
    %325 = vmatprep.mubr.f32.mxu0 0.0
    %326 = vmatmul.mubr.f32.gmra.mrb[0].mxu0 %v228
    %v327 = vpop.f32.mrb[0].mxu0
    %v328 = vadd.f32 %v210, %v327
    %v329 = vpop.f32.mrb[0].mxu0
    %330 = vmatprep.mubr.f32.mxu0 0.0
    %331 = vmatmul.mubr.f32.gmra.mrb[0].mxu0 %v231
    %v332 = vpop.f32.mrb[0].mxu0
    %v333 = vadd.f32 %v210, %v332
    %v334 = vpop.f32.mrb[0].mxu0
    %335 = vmatprep.mubr.f32.mxu0 0.0
    %336 = vmatmul.mubr.f32.gmra.mrb[0].mxu0 %v234
    %v337 = vpop.f32.mrb[0].mxu0
    %v338 = vadd.f32 %v210, %v337
    %v339 = vpop.f32.mrb[0].mxu0
    %340 = vdwg.mxu0
    %v342 = vcombine.high %v198, %v198
    %v344 = vunpack.c.l.s4 1966171168
    %v345 = vunpack.c.0.s8 %v344
    %v346 = vlaneseq
    %v347 = vshrl.u32 %v346, 7
    %v348 = vsub.s32 %v345, %v347
    %v349 = vrot.slane %v198, %v348
    %v351 = vunpack.c.l.s4 1966171168
    %v352 = vunpack.c.0.s8 %v351
    %v353 = vlaneseq
    %v354 = vshrl.u32 %v353, 7
    %v355 = vsub.s32 %v352, %v354
    %v356 = vrot.slane %v342, %v355
    %v357 = vcombine.high %v349, %v349
    %v358 = vcombine.high %v356, %v356
    %v360 = vunpack.c.l.s4 1966171168
    %v361 = vunpack.c.0.s8 %v360
    %v362 = vlaneseq
    %v363 = vshrl.u32 %v362, 7
    %v364 = vsub.s32 %v361, %v363
    %v365 = vrot.slane %v349, %v364
    %v367 = vunpack.c.l.s4 1966171168
    %v368 = vunpack.c.0.s8 %v367
    %v369 = vlaneseq
    %v370 = vshrl.u32 %v369, 7
    %v371 = vsub.s32 %v368, %v370
    %v372 = vrot.slane %v356, %v371
    %v374 = vunpack.c.l.s4 1966171168
    %v375 = vunpack.c.0.s8 %v374
    %v376 = vlaneseq
    %v377 = vshrl.u32 %v376, 7
    %v378 = vsub.s32 %v375, %v377
    %v379 = vrot.slane %v357, %v378
    %v381 = vunpack.c.l.s4 1966171168
    %v382 = vunpack.c.0.s8 %v381
    %v383 = vlaneseq
    %v384 = vshrl.u32 %v383, 7
    %v385 = vsub.s32 %v382, %v384
    %v386 = vrot.slane %v358, %v385
    %v387 = vcombine.high %v365, %v365
    %v388 = vcombine.high %v372, %v372
    %v389 = vcombine.high %v379, %v379
    %v390 = vcombine.high %v386, %v386
    %v391 = vlaneseq
    %v392 = vshrl.u32 %v391, 7
    %v393 = vsub.s32 0, %v392
    %v394 = vrot.slane %v365, %v393
    %v395 = vlaneseq
    %v396 = vshrl.u32 %v395, 7
    %v397 = vsub.s32 0, %v396
    %v398 = vrot.slane %v379, %v397
    %v399 = vlaneseq
    %v400 = vshrl.u32 %v399, 7
    %v401 = vsub.s32 0, %v400
    %v402 = vrot.slane %v387, %v401
    %v403 = vlaneseq
    %v404 = vshrl.u32 %v403, 7
    %v405 = vsub.s32 0, %v404
    %v406 = vrot.slane %v389, %v405
    %v407 = vlaneseq
    %v408 = vshrl.u32 %v407, 7
    %v409 = vsub.s32 0, %v408
    %v410 = vrot.slane %v372, %v409
    %v411 = vlaneseq
    %v412 = vshrl.u32 %v411, 7
    %v413 = vsub.s32 0, %v412
    %v414 = vrot.slane %v386, %v413
    %v415 = vlaneseq
    %v416 = vshrl.u32 %v415, 7
    %v417 = vsub.s32 0, %v416
    %v418 = vrot.slane %v388, %v417
    %v419 = vlaneseq
    %v420 = vshrl.u32 %v419, 7
    %v421 = vsub.s32 0, %v420
    %v422 = vrot.slane %v390, %v421
    %v431 = vadd.f32 %v394, %v303
    %v432 = vadd.f32 %v398, %v308
    %v433 = vadd.f32 %v402, %v313
    %v434 = vadd.f32 %v406, %v318
    %v435 = vadd.f32 %v410, %v323
    %v436 = vadd.f32 %v414, %v328
    %v437 = vadd.f32 %v418, %v333
    %v438 = vadd.f32 %v422, %v338
    %v439 = vtanh.pop %v431
    %v440 = vtanh.pop %v432
    %v441 = vtanh.pop %v433
    %v442 = vtanh.pop %v434
    %v443 = vtanh.pop %v435
    %v444 = vtanh.pop %v436
    %v445 = vtanh.pop %v437
    %v446 = vtanh.pop %v438
    %v447 = vld [vmem:[#allocation10] sm:$0x1]
    %v449 = vlaneseq
    %v450 = vshrl.u32 %v449, 7
    %v451 = vsub.s32 0, %v450
    %v452 = vrot.slane %v447, %v451
    %v454 = vmul.f32 %v439, %v452
    %v455 = vmul.f32 %v440, %v452
    %v456 = vmul.f32 %v441, %v452
    %v457 = vmul.f32 %v442, %v452
    %v458 = vmul.f32 %v443, %v452
    %v459 = vmul.f32 %v444, %v452
    %v460 = vmul.f32 %v445, %v452
    %v461 = vmul.f32 %v446, %v452
    %v462 = vsel %vm127, %v454, 0.0
    %463 = vadd.xlane.f32.xlu0 %v462
    %v464 = vpop.xlane.xlu0 %463
    %v465 = vsel %vm127, %v455, 0.0
    %466 = vadd.xlane.f32.xlu0 %v465
    %v467 = vpop.xlane.xlu0 %466
    %v468 = vsel %vm127, %v456, 0.0
    %469 = vadd.xlane.f32.xlu0 %v468
    %v470 = vpop.xlane.xlu0 %469
    %v471 = vsel %vm127, %v457, 0.0
    %472 = vadd.xlane.f32.xlu0 %v471
    %v473 = vpop.xlane.xlu0 %472
    %v474 = vsel %vm127, %v458, 0.0
    %475 = vadd.xlane.f32.xlu0 %v474
    %v476 = vpop.xlane.xlu0 %475
    %v477 = vsel %vm127, %v459, 0.0
    %478 = vadd.xlane.f32.xlu0 %v477
    %v479 = vpop.xlane.xlu0 %478
    %v480 = vsel %vm127, %v460, 0.0
    %481 = vadd.xlane.f32.xlu0 %v480
    %v482 = vpop.xlane.xlu0 %481
    %v483 = vsel %vm127, %v461, 0.0
    %484 = vadd.xlane.f32.xlu0 %v483
    %v485 = vpop.xlane.xlu0 %484
    %v494 = vlaneseq
    %v495 = vand.u32 %v494, 127
    %v496 = vlaneseq
    %v497 = vshrl.u32 %v496, 7
    %v498 = vsub.s32 %v495, %v497
    %v499 = vrot.slane %v464, %v498
    %v500 = vlaneseq
    %v501 = vshrl.u32 %v500, 7
    %v502 = vsub.s32 %v495, %v501
    %v503 = vrot.slane %v467, %v502
    %v504 = vlaneseq
    %v505 = vshrl.u32 %v504, 7
    %v506 = vsub.s32 %v495, %v505
    %v507 = vrot.slane %v470, %v506
    %v508 = vlaneseq
    %v509 = vshrl.u32 %v508, 7
    %v510 = vsub.s32 %v495, %v509
    %v511 = vrot.slane %v473, %v510
    %v512 = vlaneseq
    %v513 = vshrl.u32 %v512, 7
    %v514 = vsub.s32 %v495, %v513
    %v515 = vrot.slane %v476, %v514
    %v516 = vlaneseq
    %v517 = vshrl.u32 %v516, 7
    %v518 = vsub.s32 %v495, %v517
    %v519 = vrot.slane %v479, %v518
    %v520 = vlaneseq
    %v521 = vshrl.u32 %v520, 7
    %v522 = vsub.s32 %v495, %v521
    %v523 = vrot.slane %v482, %v522
    %v524 = vlaneseq
    %v525 = vshrl.u32 %v524, 7
    %v526 = vsub.s32 %v495, %v525
    %v527 = vrot.slane %v485, %v526
    %vm528 = vcmask 1041409
    %v529 = vsel %vm528, %v503, %v499
    %vm530 = vcmask 1042434
    %v531 = vsel %vm530, %v507, %v529
    %vm532 = vcmask 1043459
    %v533 = vsel %vm532, %v511, %v531
    %vm534 = vcmask 1044484
    %v535 = vsel %vm534, %v515, %v533
    %vm536 = vcmask 1045509
    %v537 = vsel %vm536, %v519, %v535
    %vm538 = vcmask 1046534
    %v539 = vsel %vm538, %v523, %v537
    %vm540 = vcmask 1047559
    %v541 = vsel %vm540, %v527, %v539
    %vm543 = vcmask 64512
    %v544 = vsel %vm543, %v541, -inf
    %545 = vmax.xlane.f32.xlu0 %v544
    %v546 = vpop.xlane.xlu0 %545
    %v548 = vlaneseq
    %v549 = vshrl.u32 %v548, 7
    %v550 = vsub.s32 0, %v549
    %v551 = vrot.slane %v546, %v550
    %v552 = vlaneseq
    %v553 = vshrl.u32 %v552, 7
    %v554 = vsub.s32 1, %v553
    %v555 = vrot.slane %v546, %v554
    %v556 = vlaneseq
    %v557 = vshrl.u32 %v556, 7
    %v558 = vsub.s32 2, %v557
    %v559 = vrot.slane %v546, %v558
    %v560 = vlaneseq
    %v561 = vshrl.u32 %v560, 7
    %v562 = vsub.s32 3, %v561
    %v563 = vrot.slane %v546, %v562
    %v564 = vlaneseq
    %v565 = vshrl.u32 %v564, 7
    %v566 = vsub.s32 4, %v565
    %v567 = vrot.slane %v546, %v566
    %v568 = vlaneseq
    %v569 = vshrl.u32 %v568, 7
    %v570 = vsub.s32 5, %v569
    %v571 = vrot.slane %v546, %v570
    %v572 = vlaneseq
    %v573 = vshrl.u32 %v572, 7
    %v574 = vsub.s32 6, %v573
    %v575 = vrot.slane %v546, %v574
    %v576 = vlaneseq
    %v577 = vshrl.u32 %v576, 7
    %v578 = vsub.s32 7, %v577
    %v579 = vrot.slane %v546, %v578
    %v588 = vsub.f32 %v464, %v551
    %v589 = vsub.f32 %v467, %v555
    %v590 = vsub.f32 %v470, %v559
    %v591 = vsub.f32 %v473, %v563
    %v592 = vsub.f32 %v476, %v567
    %v593 = vsub.f32 %v479, %v571
    %v594 = vsub.f32 %v482, %v575
    %v595 = vsub.f32 %v485, %v579
    %v596 = vmul.f32 %v588, 1.442695
    %v597 = vpow.pop %v596
    %v598 = vmul.f32 %v589, 1.442695
    %v599 = vpow.pop %v598
    %v600 = vmul.f32 %v590, 1.442695
    %v601 = vpow.pop %v600
    %v602 = vmul.f32 %v591, 1.442695
    %v603 = vpow.pop %v602
    %v604 = vmul.f32 %v592, 1.442695
    %v605 = vpow.pop %v604
    %v606 = vmul.f32 %v593, 1.442695
    %v607 = vpow.pop %v606
    %v608 = vmul.f32 %v594, 1.442695
    %v609 = vpow.pop %v608
    %v610 = vmul.f32 %v595, 1.442695
    %v611 = vpow.pop %v610
    %620 = vset.pattern.permute.xlu0 0
    %621 = vperm.xlu0 %620, %v597
    %v622 = vpop.permute.xlu0 %621
    %623 = vset.pattern.permute.xlu0 0
    %624 = vperm.xlu0 %623, %v599
    %v625 = vpop.permute.xlu0 %624
    %626 = vset.pattern.permute.xlu0 0
    %627 = vperm.xlu0 %626, %v601
    %v628 = vpop.permute.xlu0 %627
    %629 = vset.pattern.permute.xlu0 0
    %630 = vperm.xlu0 %629, %v603
    %v631 = vpop.permute.xlu0 %630
    %632 = vset.pattern.permute.xlu0 0
    %633 = vperm.xlu0 %632, %v605
    %v634 = vpop.permute.xlu0 %633
    %635 = vset.pattern.permute.xlu0 0
    %636 = vperm.xlu0 %635, %v607
    %v637 = vpop.permute.xlu0 %636
    %638 = vset.pattern.permute.xlu0 0
    %639 = vperm.xlu0 %638, %v609
    %v640 = vpop.permute.xlu0 %639
    %641 = vset.pattern.permute.xlu0 0
    %642 = vperm.xlu0 %641, %v611
    %v643 = vpop.permute.xlu0 %642
    %v644 = vlaneseq
    %v645 = vshrl.u32 %v644, 7
    %v646 = vsub.s32 %v495, %v645
    %v647 = vrot.slane %v622, %v646
    %v648 = vlaneseq
    %v649 = vshrl.u32 %v648, 7
    %v650 = vsub.s32 %v495, %v649
    %v651 = vrot.slane %v625, %v650
    %v652 = vlaneseq
    %v653 = vshrl.u32 %v652, 7
    %v654 = vsub.s32 %v495, %v653
    %v655 = vrot.slane %v628, %v654
    %v656 = vlaneseq
    %v657 = vshrl.u32 %v656, 7
    %v658 = vsub.s32 %v495, %v657
    %v659 = vrot.slane %v631, %v658
    %v660 = vlaneseq
    %v661 = vshrl.u32 %v660, 7
    %v662 = vsub.s32 %v495, %v661
    %v663 = vrot.slane %v634, %v662
    %v664 = vlaneseq
    %v665 = vshrl.u32 %v664, 7
    %v666 = vsub.s32 %v495, %v665
    %v667 = vrot.slane %v637, %v666
    %v668 = vlaneseq
    %v669 = vshrl.u32 %v668, 7
    %v670 = vsub.s32 %v495, %v669
    %v671 = vrot.slane %v640, %v670
    %v672 = vlaneseq
    %v673 = vshrl.u32 %v672, 7
    %v674 = vsub.s32 %v495, %v673
    %v675 = vrot.slane %v643, %v674
    %v676 = vsel %vm528, %v651, %v647
    %v677 = vsel %vm530, %v655, %v676
    %v678 = vsel %vm532, %v659, %v677
    %v679 = vsel %vm534, %v663, %v678
    %v680 = vsel %vm536, %v667, %v679
    %v681 = vsel %vm538, %v671, %v680
    %v682 = vsel %vm540, %v675, %v681
    %v684 = vsel %vm543, %v682, 0.0
    %685 = vadd.xlane.f32.xlu0 %v684
    %v686 = vpop.xlane.xlu0 %685
    %v688 = vlaneseq
    %v689 = vshrl.u32 %v688, 7
    %v690 = vsub.s32 0, %v689
    %v691 = vrot.slane %v686, %v690
    %v692 = vlaneseq
    %v693 = vshrl.u32 %v692, 7
    %v694 = vsub.s32 1, %v693
    %v695 = vrot.slane %v686, %v694
    %v696 = vlaneseq
    %v697 = vshrl.u32 %v696, 7
    %v698 = vsub.s32 2, %v697
    %v699 = vrot.slane %v686, %v698
    %v700 = vlaneseq
    %v701 = vshrl.u32 %v700, 7
    %v702 = vsub.s32 3, %v701
    %v703 = vrot.slane %v686, %v702
    %v704 = vlaneseq
    %v705 = vshrl.u32 %v704, 7
    %v706 = vsub.s32 4, %v705
    %v707 = vrot.slane %v686, %v706
    %v708 = vlaneseq
    %v709 = vshrl.u32 %v708, 7
    %v710 = vsub.s32 5, %v709
    %v711 = vrot.slane %v686, %v710
    %v712 = vlaneseq
    %v713 = vshrl.u32 %v712, 7
    %v714 = vsub.s32 6, %v713
    %v715 = vrot.slane %v686, %v714
    %v716 = vlaneseq
    %v717 = vshrl.u32 %v716, 7
    %v718 = vsub.s32 7, %v717
    %v719 = vrot.slane %v686, %v718
    %v728 = vrcp.pop %v691
    %v729 = vmul.f32 %v597, %v728
    %v730 = vrcp.pop %v695
    %v731 = vmul.f32 %v599, %v730
    %v732 = vrcp.pop %v699
    %v733 = vmul.f32 %v601, %v732
    %v734 = vrcp.pop %v703
    %v735 = vmul.f32 %v603, %v734
    %v736 = vrcp.pop %v707
    %v737 = vmul.f32 %v605, %v736
    %v738 = vrcp.pop %v711
    %v739 = vmul.f32 %v607, %v738
    %v740 = vrcp.pop %v715
    %v741 = vmul.f32 %v609, %v740
    %v742 = vrcp.pop %v719
    %v743 = vmul.f32 %v611, %v742
    %745 = vset.pattern.permute.xlu0 0
    %746 = vperm.xlu0 %745, %v729
    %v747 = vpop.permute.xlu0 %746
    %750 = vset.pattern.permute.xlu0 0
    %751 = vperm.xlu0 %750, %v731
    %v752 = vpop.permute.xlu0 %751
    %755 = vset.pattern.permute.xlu0 0
    %756 = vperm.xlu0 %755, %v733
    %v757 = vpop.permute.xlu0 %756
    %760 = vset.pattern.permute.xlu0 0
    %761 = vperm.xlu0 %760, %v735
    %v762 = vpop.permute.xlu0 %761
    %765 = vset.pattern.permute.xlu0 0
    %766 = vperm.xlu0 %765, %v737
    %v767 = vpop.permute.xlu0 %766
    %770 = vset.pattern.permute.xlu0 0
    %771 = vperm.xlu0 %770, %v739
    %v772 = vpop.permute.xlu0 %771
    %775 = vset.pattern.permute.xlu0 0
    %776 = vperm.xlu0 %775, %v741
    %v777 = vpop.permute.xlu0 %776
    %780 = vset.pattern.permute.xlu0 0
    %781 = vperm.xlu0 %780, %v743
    %v782 = vpop.permute.xlu0 %781
    %v784 = vmul.f32 %v747, %v303
    %v785 = vmul.f32 %v752, %v308
    %v786 = vmul.f32 %v757, %v313
    %v787 = vmul.f32 %v762, %v318
    %v788 = vmul.f32 %v767, %v323
    %v789 = vmul.f32 %v772, %v328
    %v790 = vmul.f32 %v777, %v333
    %v791 = vmul.f32 %v782, %v338
    %v792 = vsel %vm127, %v784, 0.0
    %v793 = vrot.slane %v792, 4
    %v794 = vadd.f32 %v792, %v793
    %v795 = vrot.slane %v794, 2
    %v796 = vadd.f32 %v794, %v795
    %v797 = vrot.slane %v796, 1
    %v798 = vadd.f32 %v796, %v797
    %v799 = vsel %vm127, %v785, 0.0
    %v800 = vrot.slane %v799, 4
    %v801 = vadd.f32 %v799, %v800
    %v802 = vrot.slane %v801, 2
    %v803 = vadd.f32 %v801, %v802
    %v804 = vrot.slane %v803, 1
    %v805 = vadd.f32 %v803, %v804
    %v806 = vsel %vm127, %v786, 0.0
    %v807 = vrot.slane %v806, 4
    %v808 = vadd.f32 %v806, %v807
    %v809 = vrot.slane %v808, 2
    %v810 = vadd.f32 %v808, %v809
    %v811 = vrot.slane %v810, 1
    %v812 = vadd.f32 %v810, %v811
    %v813 = vsel %vm127, %v787, 0.0
    %v814 = vrot.slane %v813, 4
    %v815 = vadd.f32 %v813, %v814
    %v816 = vrot.slane %v815, 2
    %v817 = vadd.f32 %v815, %v816
    %v818 = vrot.slane %v817, 1
    %v819 = vadd.f32 %v817, %v818
    %v820 = vsel %vm127, %v788, 0.0
    %v821 = vrot.slane %v820, 4
    %v822 = vadd.f32 %v820, %v821
    %v823 = vrot.slane %v822, 2
    %v824 = vadd.f32 %v822, %v823
    %v825 = vrot.slane %v824, 1
    %v826 = vadd.f32 %v824, %v825
    %v827 = vsel %vm127, %v789, 0.0
    %v828 = vrot.slane %v827, 4
    %v829 = vadd.f32 %v827, %v828
    %v830 = vrot.slane %v829, 2
    %v831 = vadd.f32 %v829, %v830
    %v832 = vrot.slane %v831, 1
    %v833 = vadd.f32 %v831, %v832
    %v834 = vsel %vm127, %v790, 0.0
    %v835 = vrot.slane %v834, 4
    %v836 = vadd.f32 %v834, %v835
    %v837 = vrot.slane %v836, 2
    %v838 = vadd.f32 %v836, %v837
    %v839 = vrot.slane %v838, 1
    %v840 = vadd.f32 %v838, %v839
    %v841 = vsel %vm127, %v791, 0.0
    %v842 = vrot.slane %v841, 4
    %v843 = vadd.f32 %v841, %v842
    %v844 = vrot.slane %v843, 2
    %v845 = vadd.f32 %v843, %v844
    %v846 = vrot.slane %v845, 1
    %v847 = vadd.f32 %v845, %v846
    %v856 = vsel %vm528, %v805, %v798
    %v857 = vsel %vm530, %v812, %v856
    %v858 = vsel %vm532, %v819, %v857
    %v859 = vsel %vm534, %v826, %v858
    %v860 = vsel %vm536, %v833, %v859
    %v861 = vsel %vm538, %v840, %v860
    %v862 = vsel %vm540, %v847, %v861
    %v864 = vadd.f32 %v105, %v862
    %865 = vrot.lane.b32.xlu0 %v198, 32
    %v866 = vpop.permute.xlu0 %865
    %v868 = vsel %vm127, %v864, %v866
    %v869 = vld [vmem:[%s9] sm:$0xff]
    %v870 = vld [vmem:[%s9 + $0x8] sm:$0xff]
    %v871 = vld [vmem:[%s9 + $0x10] sm:$0xff]
    %v872 = vld [vmem:[%s9 + $0x18] sm:$0xff]
    %v873 = vld [vmem:[%s9 + $0x20] sm:$0xff]
    %v874 = vld [vmem:[%s9 + $0x28] sm:$0xff]
    %v875 = vld [vmem:[%s9 + $0x30] sm:$0xff]
    %v876 = vld [vmem:[%s9 + $0x38] sm:$0xff]
    %v877 = vld [vmem:[%s10] sm:$0x1]
    %v879 = vlaneseq
    %v880 = vshrl.u32 %v879, 7
    %v881 = vsub.s32 0, %v880
    %v882 = vrot.slane %v877, %v881
    %vm884 = vcmask 523264
    %v886 = vsel %vm884, %v868, 0
    %888 = vmatprep.subr.mxu0 0.0
    %889 = vmatpush1.msra.mxu0 %v869
    %890 = vmatprep.subr.mxu0 0.0
    %891 = vmatpush1.msra.mxu0 %v870
    %892 = vmatprep.subr.mxu0 0.0
    %893 = vmatpush1.msra.mxu0 %v871
    %894 = vmatprep.subr.mxu0 0.0
    %895 = vmatpush1.msra.mxu0 %v872
    %896 = vmatprep.subr.mxu0 0.0
    %897 = vmatpush1.msra.mxu0 %v873
    %898 = vmatprep.subr.mxu0 0.0
    %899 = vmatpush1.msra.mxu0 %v874
    %900 = vmatprep.subr.mxu0 0.0
    %901 = vmatpush1.msra.mxu0 %v875
    %902 = vmatprep.subr.mxu0 0.0
    %903 = vmatpush1.msra.mxu0 %v876
    %904 = vmatprep.subr.mxu0 0.0
    %905 = vmatpush1.msra.mxu0 0.0
    %906 = vmatprep.subr.mxu0 0.0
    %907 = vmatpush1.msra.mxu0 0.0
    %908 = vmatprep.subr.mxu0 0.0
    %909 = vmatpush1.msra.mxu0 0.0
    %910 = vmatprep.subr.mxu0 0.0
    %911 = vmatpush1.msra.mxu0 0.0
    %912 = vmatprep.subr.mxu0 0.0
    %913 = vmatpush1.msra.mxu0 0.0
    %914 = vmatprep.subr.mxu0 0.0
    %915 = vmatpush1.msra.mxu0 0.0
    %916 = vmatprep.subr.mxu0 0.0
    %917 = vmatpush1.msra.mxu0 0.0
    %918 = vmatprep.subr.mxu0 0.0
    %919 = vmatpush1.msra.mxu0 0.0
    %920 = vmatprep.subr.mxu0 0.0
    %921 = vmatpush1.msra.mxu0 0.0
    %922 = vmatprep.subr.mxu0 0.0
    %923 = vmatpush1.msra.mxu0 0.0
    %924 = vmatprep.subr.mxu0 0.0
    %925 = vmatpush1.msra.mxu0 0.0
    %926 = vmatprep.subr.mxu0 0.0
    %927 = vmatpush1.msra.mxu0 0.0
    %928 = vmatprep.subr.mxu0 0.0
    %929 = vmatpush1.msra.mxu0 0.0
    %930 = vmatprep.subr.mxu0 0.0
    %931 = vmatpush1.msra.mxu0 0.0
    %932 = vmatprep.subr.mxu0 0.0
    %933 = vmatpush1.msra.mxu0 0.0
    %934 = vmatprep.subr.mxu0 0.0
    %935 = vmatpush1.msra.mxu0 0.0
    %936 = vmatprep.subr.mxu0 0.0
    %937 = vmatpush1.msra.mxu0 0.0
    %938 = vmatprep.subr.mxu0 0.0
    %939 = vmatpush1.msra.mxu0 0.0
    %940 = vmatprep.subr.mxu0 0.0
    %941 = vmatpush1.msra.mxu0 0.0
    %942 = vmatprep.subr.mxu0 0.0
    %943 = vmatpush1.msra.mxu0 0.0
    %944 = vmatprep.subr.mxu0 0.0
    %945 = vmatpush1.msra.mxu0 0.0
    %946 = vmatprep.subr.mxu0 0.0
    %947 = vmatpush1.msra.mxu0 0.0
    %948 = vmatprep.subr.mxu0 0.0
    %949 = vmatpush1.msra.mxu0 0.0
    %950 = vmatprep.subr.mxu0 0.0
    %951 = vmatpush1.msra.mxu0 0.0
    %952 = vmatprep.mubr.f32.mxu0 0.0
    %953 = vmatmul.mubr.f32.gmra.mrb[0].mxu0 %v886
    %v954 = vpop.f32.mrb[0].mxu0
    %v955 = vadd.f32 %v882, %v954
    %v956 = vpop.f32.mrb[0].mxu0
    %957 = vdwg.mxu0
    %v958 = vxor.u32 %v955, 2147483648
    %v959 = vmul.f32 %v958, 1.442695
    %v960 = vpow.pop %v959
    %v961 = vadd.f32 %v960, 1.0
    %v962 = vrcp.pop %v961
    %v963 = vmul.f32 1.0, %v962
    %v964 = vtanh.pop %v955
    %966 = vrot.lane.b32.xlu0 %v107, 32
    %v967 = vpop.permute.xlu0 %966
    %v969 = vmul.f32 %v963, %v967
    %971 = vrot.lane.b32.xlu0 %v964, 64
    %v972 = vpop.permute.xlu0 %971
    %v974 = vmul.f32 %v963, %v972
    %976 = vrot.lane.b32.xlu0 %v974, 32
    %v977 = vpop.permute.xlu0 %976
    %v979 = vadd.f32 %v969, %v977
    %v980 = vtanh.pop %v979
    %982 = vrot.lane.b32.xlu0 %v980, 64
    %v983 = vpop.permute.xlu0 %982
    %v985 = vmul.f32 %v963, %v983
    %v986 = vld [vmem:[%s11] sm:$0xff]
    %v987 = vld [vmem:[%s11 + $0x8] sm:$0xff]
    %v988 = vld [vmem:[%s11 + $0x10] sm:$0xff]
    %v989 = vld [vmem:[%s11 + $0x18] sm:$0xff]
    %v990 = vld [vmem:[%s12] sm:$0x1]
    %v992 = vlaneseq
    %v993 = vshrl.u32 %v992, 7
    %v994 = vsub.s32 0, %v993
    %v995 = vrot.slane %v990, %v994
    %998 = vrot.lane.b32.xlu0 %v985, 32
    %v999 = vpop.permute.xlu0 %998
    %v1000 = vsel %vm127, %v999, 0
    %1002 = vmatprep.subr.mxu0 0.0
    %1003 = vmatpush1.msra.mxu0 %v986
    %1004 = vmatprep.subr.mxu0 0.0
    %1005 = vmatpush1.msra.mxu0 %v987
    %1006 = vmatprep.subr.mxu0 0.0
    %1007 = vmatpush1.msra.mxu0 %v988
    %1008 = vmatprep.subr.mxu0 0.0
    %1009 = vmatpush1.msra.mxu0 %v989
    %1010 = vmatprep.subr.mxu0 0.0
    %1011 = vmatpush1.msra.mxu0 0.0
    %1012 = vmatprep.subr.mxu0 0.0
    %1013 = vmatpush1.msra.mxu0 0.0
    %1014 = vmatprep.subr.mxu0 0.0
    %1015 = vmatpush1.msra.mxu0 0.0
    %1016 = vmatprep.subr.mxu0 0.0
    %1017 = vmatpush1.msra.mxu0 0.0
    %1018 = vmatprep.subr.mxu0 0.0
    %1019 = vmatpush1.msra.mxu0 0.0
    %1020 = vmatprep.subr.mxu0 0.0
    %1021 = vmatpush1.msra.mxu0 0.0
    %1022 = vmatprep.subr.mxu0 0.0
    %1023 = vmatpush1.msra.mxu0 0.0
    %1024 = vmatprep.subr.mxu0 0.0
    %1025 = vmatpush1.msra.mxu0 0.0
    %1026 = vmatprep.subr.mxu0 0.0
    %1027 = vmatpush1.msra.mxu0 0.0
    %1028 = vmatprep.subr.mxu0 0.0
    %1029 = vmatpush1.msra.mxu0 0.0
    %1030 = vmatprep.subr.mxu0 0.0
    %1031 = vmatpush1.msra.mxu0 0.0
    %1032 = vmatprep.subr.mxu0 0.0
    %1033 = vmatpush1.msra.mxu0 0.0
    %1034 = vmatprep.subr.mxu0 0.0
    %1035 = vmatpush1.msra.mxu0 0.0
    %1036 = vmatprep.subr.mxu0 0.0
    %1037 = vmatpush1.msra.mxu0 0.0
    %1038 = vmatprep.subr.mxu0 0.0
    %1039 = vmatpush1.msra.mxu0 0.0
    %1040 = vmatprep.subr.mxu0 0.0
    %1041 = vmatpush1.msra.mxu0 0.0
    %1042 = vmatprep.subr.mxu0 0.0
    %1043 = vmatpush1.msra.mxu0 0.0
    %1044 = vmatprep.subr.mxu0 0.0
    %1045 = vmatpush1.msra.mxu0 0.0
    %1046 = vmatprep.subr.mxu0 0.0
    %1047 = vmatpush1.msra.mxu0 0.0
    %1048 = vmatprep.subr.mxu0 0.0
    %1049 = vmatpush1.msra.mxu0 0.0
    %1050 = vmatprep.subr.mxu0 0.0
    %1051 = vmatpush1.msra.mxu0 0.0
    %1052 = vmatprep.subr.mxu0 0.0
    %1053 = vmatpush1.msra.mxu0 0.0
    %1054 = vmatprep.subr.mxu0 0.0
    %1055 = vmatpush1.msra.mxu0 0.0
    %1056 = vmatprep.subr.mxu0 0.0
    %1057 = vmatpush1.msra.mxu0 0.0
    %1058 = vmatprep.subr.mxu0 0.0
    %1059 = vmatpush1.msra.mxu0 0.0
    %1060 = vmatprep.subr.mxu0 0.0
    %1061 = vmatpush1.msra.mxu0 0.0
    %1062 = vmatprep.subr.mxu0 0.0
    %1063 = vmatpush1.msra.mxu0 0.0
    %1064 = vmatprep.subr.mxu0 0.0
    %1065 = vmatpush1.msra.mxu0 0.0
    %1066 = vmatprep.mubr.f32.mxu0 0.0
    %1067 = vmatmul.mubr.f32.gmra.mrb[0].mxu0 %v1000
    %v1068 = vpop.f32.mrb[0].mxu0
    %v1069 = vadd.f32 %v995, %v1068
    %v1070 = vpop.f32.mrb[0].mxu0
    %1071 = vdwg.mxu0
    %vm1072 = vcmp.ge.s32.totalorder %v495, 0
    %vm1073 = vcmp.lt.s32.totalorder %v495, 6
    %vm1074 = vmand %vm1072, %vm1073
    %v1075 = vsel %vm1074, %v1069, -inf
    %1076 = vmax.xlane.f32.xlu0 %v1075
    %v1077 = vpop.xlane.xlu0 %1076
    %v1078 = vsub.f32 %v1075, %v1077
    %v1079 = vmul.f32 %v1078, 1.442695
    %v1080 = vpow.pop %v1079
    %1081 = vadd.xlane.f32.xlu0 %v1080
    %v1082 = vpop.xlane.xlu0 %1081
    %v1083 = vlog2.pop %v1082
    %v1084 = vmul.f32 %v1083, 0.6931472
    %v1085 = vsub.f32 %v1069, %v1077
    %v1086 = vsub.f32 %v1085, %v1084
    %v1087 = vsel %vm1074, %v1086, 0.0
    %vm1088 = vcmp.ge.s32.totalorder %v495, 6
    %vm1089 = vcmp.lt.s32.totalorder %v495, 10
    %vm1090 = vmand %vm1088, %vm1089
    %v1091 = vsel %vm1090, %v1069, -inf
    %1092 = vmax.xlane.f32.xlu0 %v1091
    %v1093 = vpop.xlane.xlu0 %1092
    %v1094 = vsub.f32 %v1091, %v1093
    %v1095 = vmul.f32 %v1094, 1.442695
    %v1096 = vpow.pop %v1095
    %1097 = vadd.xlane.f32.xlu0 %v1096
    %v1098 = vpop.xlane.xlu0 %1097
    %v1099 = vlog2.pop %v1098
    %v1100 = vmul.f32 %v1099, 0.6931472
    %v1101 = vsub.f32 %v1069, %v1093
    %v1102 = vsub.f32 %v1101, %v1100
    %v1103 = vsel %vm1090, %v1102, %v1087
    %vm1104 = vcmp.ge.s32.totalorder %v495, 10
    %vm1105 = vcmp.lt.s32.totalorder %v495, 13
    %vm1106 = vmand %vm1104, %vm1105
    %v1107 = vsel %vm1106, %v1069, -inf
    %1108 = vmax.xlane.f32.xlu0 %v1107
    %v1109 = vpop.xlane.xlu0 %1108
    %v1110 = vsub.f32 %v1107, %v1109
    %v1111 = vmul.f32 %v1110, 1.442695
    %v1112 = vpow.pop %v1111
    %1113 = vadd.xlane.f32.xlu0 %v1112
    %v1114 = vpop.xlane.xlu0 %1113
    %v1115 = vlog2.pop %v1114
    %v1116 = vmul.f32 %v1115, 0.6931472
    %v1117 = vsub.f32 %v1069, %v1109
    %v1118 = vsub.f32 %v1117, %v1116
    %v1119 = vsel %vm1106, %v1118, %v1103
    %vm1120 = vcmp.ge.s32.totalorder %v495, 13
    %vm1121 = vcmp.lt.s32.totalorder %v495, 16
    %vm1122 = vmand %vm1120, %vm1121
    %v1123 = vsel %vm1122, %v1069, -inf
    %1124 = vmax.xlane.f32.xlu0 %v1123
    %v1125 = vpop.xlane.xlu0 %1124
    %v1126 = vsub.f32 %v1123, %v1125
    %v1127 = vmul.f32 %v1126, 1.442695
    %v1128 = vpow.pop %v1127
    %1129 = vadd.xlane.f32.xlu0 %v1128
    %v1130 = vpop.xlane.xlu0 %1129
    %v1131 = vlog2.pop %v1130
    %v1132 = vmul.f32 %v1131, 0.6931472
    %v1133 = vsub.f32 %v1069, %v1125
    %v1134 = vsub.f32 %v1133, %v1132
    %v1135 = vsel %vm1122, %v1134, %v1119
    %v1137 = vadd.s32 %v495, 4294967232
    %v1138 = vlaneseq
    %v1139 = vshrl.u32 %v1138, 7
    %v1140 = vsub.s32 %v1137, %v1139
    %v1141 = vrot.slane %v747, %v1140
    %v1142 = vlaneseq
    %v1143 = vshrl.u32 %v1142, 7
    %v1144 = vsub.s32 %v1137, %v1143
    %v1145 = vrot.slane %v752, %v1144
    %v1146 = vlaneseq
    %v1147 = vshrl.u32 %v1146, 7
    %v1148 = vsub.s32 %v1137, %v1147
    %v1149 = vrot.slane %v757, %v1148
    %v1150 = vlaneseq
    %v1151 = vshrl.u32 %v1150, 7
    %v1152 = vsub.s32 %v1137, %v1151
    %v1153 = vrot.slane %v762, %v1152
    %v1154 = vlaneseq
    %v1155 = vshrl.u32 %v1154, 7
    %v1156 = vsub.s32 %v1137, %v1155
    %v1157 = vrot.slane %v767, %v1156
    %v1158 = vlaneseq
    %v1159 = vshrl.u32 %v1158, 7
    %v1160 = vsub.s32 %v1137, %v1159
    %v1161 = vrot.slane %v772, %v1160
    %v1162 = vlaneseq
    %v1163 = vshrl.u32 %v1162, 7
    %v1164 = vsub.s32 %v1137, %v1163
    %v1165 = vrot.slane %v777, %v1164
    %v1166 = vlaneseq
    %v1167 = vshrl.u32 %v1166, 7
    %v1168 = vsub.s32 %v1137, %v1167
    %v1169 = vrot.slane %v782, %v1168
    %v1170 = vsel %vm528, %v1145, %v1141
    %v1171 = vsel %vm530, %v1149, %v1170
    %v1172 = vsel %vm532, %v1153, %v1171
    %v1173 = vsel %vm534, %v1157, %v1172
    %v1174 = vsel %vm536, %v1161, %v1173
    %v1175 = vsel %vm538, %v1165, %v1174
    %v1176 = vsel %vm540, %v1169, %v1175
    %v1178 = vsel %vm127, %v999, %v979
    %v1179 = vsel %vm884, %v1178, %v1176
    %vm1180 = vcmask 588800
    %v1181 = vsel %vm1180, %v1179, 0.0
    %1182 = vst [vmem:[#allocation11] sm:$0xff] %v1135
    %1183 = vst [vmem:[#allocation11 + $0x8] sm:$0xff] %v1181
    // Predicated region
    $region74: #{tpu_custom_call.1} parent=1 // pred_check
      _
    $region75: #{tpu_custom_call.1} parent=1 // pred_check_branch
      %1185 = sbr.rel (0) target = $region77
    $region76: #{tpu_custom_call.1} parent=1 // pred_region
      %s1187 = ssub.s32 256, 256
      %1188 = vsyncadd [#allocation4], %s1187
      %s1190 = sshll.u32 [#allocation11], 4
      %s1191 = int_to_ptr.vmem [resolvable:$true] %s1190
      %1193 = dma.vmem_to_hbm [thread:$0]  %s1191, 256, %s13, [#allocation4]
    $region77: #{tpu_custom_call.1} parent=1 // pred_fallthru
      _
    // Predicated region
    $region78: #{tpu_custom_call.1} parent=1 // pred_check
      _
    $region79: #{tpu_custom_call.1} parent=1 // pred_check_branch
      %1195 = sbr.rel (0) target = $region81
    $region80: #{tpu_custom_call.1} parent=1 // pred_region
      %1196 = dma.done [#allocation4], 256
    $region81: #{tpu_custom_call.1} parent=1 // pred_fallthru
      _
    %1197 = vsyncpa [#allocation3], 1
    %1198 = vsyncpa [#allocation6], 1
    %1199 = vsyncpa [#allocation9], 1
    %1200 = vsyncpa [#allocation4], 1

</llo_original>
